<compile_context>
chip_gen: v7x
topology: tpu7x:2x2x1
jax: 0.10.0
libtpu: 0.0.40
codegen_flags: <defaults>
</compile_context>

<pallas_src>
import functools

import jax
import jax.numpy as jnp
from jax.experimental import pallas as pl
from jax.experimental.pallas import tpu as pltpu


def _excitation(y, w1t_ref, w2_ref, hidden):
    """sigmoid(relu(y @ W1.T) @ W2.T) for y: (TB, C) f32; weights are (H, C)."""
    w1t = w1t_ref[...].astype(jnp.float32)                  # (H, C)
    w2 = w2_ref[...].astype(jnp.float32)                    # (H, C)
    if hidden <= 16:
        # Tiny hidden width (C // 16): unrolled VPU/XLU path, no MXU round-trip.
        s_lin = jnp.zeros(y.shape, jnp.float32)
        for k in range(hidden):                              # static unroll over H
            hk = jnp.sum(y * w1t[k:k + 1, :], axis=-1, keepdims=True)   # (TB, 1)
            hk = jnp.maximum(hk, 0.0)
            s_lin = s_lin + hk * w2[k:k + 1, :]              # (TB, C)
    else:
        hmat = jax.lax.dot_general(y, w1t, (((1,), (1,)), ((), ())),
                                   preferred_element_type=jnp.float32)
        hmat = jnp.maximum(hmat, 0.0)
        s_lin = jax.lax.dot_general(hmat, w2, (((1,), (0,)), ((), ())),
                                    preferred_element_type=jnp.float32)
    return jax.nn.sigmoid(s_lin)                             # (TB, C) f32


def _ase_flat_kernel(x_ref, w1t_ref, w2_ref, seg_ref, o_ref, *, length, hidden):
    # x_ref/o_ref: (1, TB, F) with F = C*L lane-dense; seg_ref: (C, F) 0/1 in x's dtype.
    x = x_ref[0]                                             # (TB, F), input dtype (no f32 copy)
    seg = seg_ref[...]                                       # (C, F)
    inv_l = 1.0 / float(length)

    # Segmented mean: each channel owns L consecutive lanes; MXU contraction with the
    # 0/1 segment matrix accumulates in f32 (HIGHEST precision -> exact f32 matmul).
    y = jax.lax.dot_general(
        x, seg, (((1,), (1,)), ((), ())),
        preferred_element_type=jnp.float32,
        precision=jax.lax.Precision.HIGHEST) * inv_l         # (TB, C)

    s = _excitation(y, w1t_ref, w2_ref, hidden)              # (TB, C) f32

    # Lane-dense broadcast back to F lanes: every seg column has exactly one 1, so this
    # is a pure selection (one rounding of s to x.dtype, as in the torch bf16 path).
    s_full = jax.lax.dot_general(
        s.astype(x.dtype), seg, (((1,), (0,)), ((), ())),
        preferred_element_type=x.dtype,
        precision=jax.lax.Precision.HIGHEST)                 # (TB, F)

    # Multiply in the input dtype (on v5e bf16 this is emulated via f32 anyway).
    o_ref[0] = (x * s_full).astype(o_ref.dtype)


def _ase_ncl_kernel(x_ref, w1t_ref, w2_ref, o_ref, *, length, hidden):
    # Fallback path: x_ref/o_ref are native (TB, C, L) blocks (lane-dense when L >= 128).
    x = x_ref[...]
    inv_l = 1.0 / float(length)
    # Lane-axis reduce with f32 accumulation — no materialized f32 copy of the block.
    y = jnp.sum(x, axis=-1, dtype=jnp.float32) * inv_l       # (TB, C)
    s = _excitation(y, w1t_ref, w2_ref, hidden)              # (TB, C) f32
    # Only the tiny (TB, C) scale vector is relayouted (lane -> sublane) for the broadcast.
    o_ref[...] = (x * s[:, :, None].astype(x.dtype)).astype(o_ref.dtype)


def _vmem_limit_bytes():
    cap = None
    try:
        cap = getattr(pltpu.get_tpu_info(), "vmem_capacity_bytes", None)
    except Exception:
        cap = None
    if not cap:
        cap = 64 * 1024 * 1024                  # conservative: v7x per-TC VMEM
    # Leave headroom: 96 MiB on 128 MiB parts (v5e/v6e), 48 MiB on v7x.
    return int(min(cap * 3 // 4, 96 * 1024 * 1024))


def _flat_batch_split(b, row_bytes, slab_budget):
    """tb * n_steps == b exactly (so the (n_steps, tb, F) reshape is free), with
    tb * row_bytes <= slab_budget and n_steps >= 2 whenever b >= 2.
    Returns None when only a degenerate split exists (e.g. a large prime b)."""
    if b == 1:
        return 1, 1
    cap = max(1, slab_budget // row_bytes)
    tb = None
    for cand in range(min(cap, b // 2), 0, -1):   # largest divisor of b under the cap
        if b % cand == 0:
            tb = cand
            break
    if tb is None:
        return None
    n_steps = b // tb
    if n_steps > 8 * max(2, pl.cdiv(b, cap)):     # would explode per-step overhead
        return None
    return tb, n_steps


def _ncl_batch_split(b, row_bytes, slab_budget):
    """Balanced cdiv tiling; a ragged last block is fine for (tb, C, L) blocks."""
    cap = max(1, slab_budget // row_bytes)
    n_steps = max(min(b, 2), pl.cdiv(b, cap))     # >= 2 grid steps when b >= 2
    tb = pl.cdiv(b, n_steps)
    return tb, pl.cdiv(b, tb)


def adaptive_scaling(x, w1t, w2):
    """x: (B, C, L).  w1t == torch fc[0].weight (H, C).  w2 == torch fc[2].weight.T (H, C)."""
    b, c, l = x.shape
    h = w1t.shape[0]
    assert w1t.shape == (h, c) and w2.shape == (h, c)

    itemsize = x.dtype.itemsize
    f = c * l
    row_bytes = f * itemsize

    vmem_limit = _vmem_limit_bytes()
    # ~6 block-sized slabs are live per step (in/out double-buffered + scale temp);
    # 4 MiB slabs sit above the measured HBM-roofline knee while fitting v7x's 48 MiB.
    slab_budget = max(row_bytes, min(4 * 1024 * 1024, vmem_limit // 12))
    # TODO(synk): if a single (C, L) row ever exceeds the VMEM budget, add an L-tiled
    # two-stage plan (compute s, then scale); not needed at these sizes.

    compiler_params = pltpu.CompilerParams(
        dimension_semantics=("parallel",),        # batch steps -> v7x dual-TC shardable
        vmem_limit_bytes=vmem_limit,
    )

    seg_bytes = c * f * itemsize
    flat_split = None
    if l < 128 and seg_bytes <= 2 * 1024 * 1024:
        flat_split = _flat_batch_split(b, row_bytes, slab_budget)

    if flat_split is not None:
        tb, n_steps = flat_split
        # Free (metadata-only) reshape: collapse trailing (C, L) into one lane-dense axis.
        x_flat = x.reshape(n_steps, tb, f)
        # 0/1 segment matrix: seg[c, c*L + l] = 1 (exact in any float dtype).
        seg = (jnp.arange(f, dtype=jnp.int32) // l ==
               jnp.arange(c, dtype=jnp.int32)[:, None]).astype(x.dtype)      # (C, F)

        out_flat = pl.pallas_call(
            functools.partial(_ase_flat_kernel, length=l, hidden=h),
            out_shape=jax.ShapeDtypeStruct((n_steps, tb, f), x.dtype),
            grid_spec=pltpu.PrefetchScalarGridSpec(
                num_scalar_prefetch=0,
                grid=(n_steps,),
                in_specs=[
                    pl.BlockSpec((1, tb, f), lambda i: (i, 0, 0)),   # batch tile, lane-dense F
                    pl.BlockSpec((h, c), lambda i: (0, 0)),          # W1 (torch layout (H, C))
                    pl.BlockSpec((h, c), lambda i: (0, 0)),          # W2^T ((H, C))
                    pl.BlockSpec((c, f), lambda i: (0, 0)),          # segment matrix
                ],
                out_specs=pl.BlockSpec((1, tb, f), lambda i: (i, 0, 0)),
            ),
            compiler_params=compiler_params,
        )(x_flat, w1t, w2, seg)
        return out_flat.reshape(b, c, l)

    # Fallback: native (TB, C, L) blocks — no transposes, lane-dense already when L >= 128.
    tb, n_steps = _ncl_batch_split(b, row_bytes, slab_budget)
    return pl.pallas_call(
        functools.partial(_ase_ncl_kernel, length=l, hidden=h),
        out_shape=jax.ShapeDtypeStruct((b, c, l), x.dtype),
        grid_spec=pltpu.PrefetchScalarGridSpec(
            num_scalar_prefetch=0,
            grid=(n_steps,),
            in_specs=[
                pl.BlockSpec((tb, c, l), lambda i: (i, 0, 0)),
                pl.BlockSpec((h, c), lambda i: (0, 0)),
                pl.BlockSpec((h, c), lambda i: (0, 0)),
            ],
            out_specs=pl.BlockSpec((tb, c, l), lambda i: (i, 0, 0)),
        ),
        compiler_params=compiler_params,
    )(x, w1t, w2)


def reference(x, w1t, w2):
    y = jnp.mean(x, axis=-1)                                 # (B, C)
    hh = jnp.maximum(y @ w1t.T, 0.0)                         # (B, H)
    s = jax.nn.sigmoid(hh @ w2)                              # (B, C)
    return x * s[:, :, None]


if __name__ == "__main__":
    # Module config: channel=32, reduction=16 -> hidden=2.  Batch=2, length=16.
    B, C, L, R = 2, 32, 16, 16
    H = C // R

    key = jax.random.PRNGKey(0)
    kx, k1, k2 = jax.random.split(key, 3)

    x = jax.random.normal(kx, (B, C, L), dtype=jnp.float32)
    # PyTorch Linear weights: fc[0].weight is (H, C); fc[2].weight is (C, H) -> pass its transpose.
    w1t = jax.random.normal(k1, (H, C), dtype=jnp.float32) * 0.1
    w2 = jax.random.normal(k2, (H, C), dtype=jnp.float32) * 0.1

    out = jax.block_until_ready(adaptive_scaling(x, w1t, w2))

    ref = reference(x, w1t, w2)
    assert out.shape == (B, C, L)
    assert jnp.allclose(out, ref, atol=1e-5, rtol=1e-5), "mismatch vs reference"

    print("KERNEL_OK")
</pallas_src>

<mosaic_0001>
module attributes {stable_mosaic.version = 11 : i64} {
  func.func @_ase_flat_kernel(%arg0: i32, %arg1: memref<1x1x512xf32, #tpu.memory_space<vmem>>, %arg2: memref<2x32xf32, #tpu.memory_space<vmem>>, %arg3: memref<2x32xf32, #tpu.memory_space<vmem>>, %arg4: memref<32x512xf32, #tpu.memory_space<vmem>>, %arg5: memref<1x1x512xf32, #tpu.memory_space<vmem>>) attributes {dimension_semantics = [#tpu.dimension_semantics<parallel>], iteration_bounds = array<i64: 2>, scalar_prefetch = 0 : i64, scratch_operands = 0 : i64, tpu.core_type = #tpu.core_type<tc>, window_params = [{transform_indices = @transform_0, window_bounds = array<i64: 1, 1, 512>}, {pipeline_mode = #tpu.pipeline_mode<synchronous>, transform_indices = @transform_1, window_bounds = array<i64: 2, 32>}, {pipeline_mode = #tpu.pipeline_mode<synchronous>, transform_indices = @transform_2, window_bounds = array<i64: 2, 32>}, {pipeline_mode = #tpu.pipeline_mode<synchronous>, transform_indices = @transform_3, window_bounds = array<i64: 32, 512>}, {transform_indices = @transform_4, window_bounds = array<i64: 1, 1, 512>}]} {
    %c0 = arith.constant 0 : index
    %c0_0 = arith.constant 0 : index
    %c0_1 = arith.constant 0 : index
    %0 = vector.load %arg1[%c0, %c0_0, %c0_1] : memref<1x1x512xf32, #tpu.memory_space<vmem>>, vector<1x1x512xf32>
    %1 = vector.shape_cast %0 : vector<1x1x512xf32> to vector<1x512xf32>
    %c0_2 = arith.constant 0 : index
    %c0_3 = arith.constant 0 : index
    %2 = vector.load %arg4[%c0_2, %c0_3] : memref<32x512xf32, #tpu.memory_space<vmem>>, vector<32x512xf32>
    %cst = arith.constant dense<0.000000e+00> : vector<1x32xf32>
    %3 = tpu.matmul %1, %2, %cst {dimension_numbers = #tpu.dot_dimension_numbers<[1], [1], [0], [0], [0, 0, 1, 0], [], []>, precision = #tpu.contract_precision<fp32>} : vector<1x512xf32>, vector<32x512xf32>, vector<1x32xf32> -> vector<1x32xf32>
    %cst_4 = arith.constant 6.250000e-02 : f32
    %4 = vector.broadcast %cst_4 : f32 to vector<1x32xf32>
    %5 = arith.mulf %3, %4 : vector<1x32xf32>
    %c0_5 = arith.constant 0 : index
    %c0_6 = arith.constant 0 : index
    %6 = vector.load %arg2[%c0_5, %c0_6] : memref<2x32xf32, #tpu.memory_space<vmem>>, vector<2x32xf32>
    %c0_7 = arith.constant 0 : index
    %c0_8 = arith.constant 0 : index
    %7 = vector.load %arg3[%c0_7, %c0_8] : memref<2x32xf32, #tpu.memory_space<vmem>>, vector<2x32xf32>
    %cst_9 = arith.constant 0.000000e+00 : f32
    %8 = vector.broadcast %cst_9 : f32 to vector<1x32xf32>
    %9 = vector.extract_strided_slice %6 {offsets = [0, 0], sizes = [1, 32], strides = [1, 1]} : vector<2x32xf32> to vector<1x32xf32>
    %10 = arith.mulf %5, %9 : vector<1x32xf32>
    %cst_10 = arith.constant dense<0.000000e+00> : vector<1xf32>
    %11 = vector.multi_reduction <add>, %10, %cst_10 [1] : vector<1x32xf32> to vector<1xf32>
    %12 = vector.shape_cast %11 : vector<1xf32> to vector<1x1xf32>
    %cst_11 = arith.constant 0.000000e+00 : f32
    %13 = vector.broadcast %cst_11 : f32 to vector<1x1xf32>
    %14 = arith.maximumf %12, %13 : vector<1x1xf32>
    %15 = vector.extract_strided_slice %7 {offsets = [0, 0], sizes = [1, 32], strides = [1, 1]} : vector<2x32xf32> to vector<1x32xf32>
    %16 = vector.broadcast %14 : vector<1x1xf32> to vector<1x32xf32>
    %17 = arith.mulf %16, %15 : vector<1x32xf32>
    %18 = arith.addf %8, %17 : vector<1x32xf32>
    %19 = vector.extract_strided_slice %6 {offsets = [1, 0], sizes = [1, 32], strides = [1, 1]} : vector<2x32xf32> to vector<1x32xf32>
    %20 = arith.mulf %5, %19 : vector<1x32xf32>
    %cst_12 = arith.constant dense<0.000000e+00> : vector<1xf32>
    %21 = vector.multi_reduction <add>, %20, %cst_12 [1] : vector<1x32xf32> to vector<1xf32>
    %22 = vector.shape_cast %21 : vector<1xf32> to vector<1x1xf32>
    %cst_13 = arith.constant 0.000000e+00 : f32
    %23 = vector.broadcast %cst_13 : f32 to vector<1x1xf32>
    %24 = arith.maximumf %22, %23 : vector<1x1xf32>
    %25 = vector.extract_strided_slice %7 {offsets = [1, 0], sizes = [1, 32], strides = [1, 1]} : vector<2x32xf32> to vector<1x32xf32>
    %26 = vector.broadcast %24 : vector<1x1xf32> to vector<1x32xf32>
    %27 = arith.mulf %26, %25 : vector<1x32xf32>
    %28 = arith.addf %18, %27 : vector<1x32xf32>
    %29 = arith.negf %28 : vector<1x32xf32>
    %30 = math.exp %29 : vector<1x32xf32>
    %cst_14 = arith.constant 1.000000e+00 : f32
    %31 = vector.broadcast %cst_14 : f32 to vector<1x32xf32>
    %32 = arith.addf %31, %30 : vector<1x32xf32>
    %33 = arith.divf %31, %32 : vector<1x32xf32>
    %cst_15 = arith.constant dense<0.000000e+00> : vector<1x512xf32>
    %34 = tpu.matmul %33, %2, %cst_15 {dimension_numbers = #tpu.dot_dimension_numbers<[1], [0], [0], [1], [0, 0, 1, 1], [], []>, precision = #tpu.contract_precision<fp32>} : vector<1x32xf32>, vector<32x512xf32>, vector<1x512xf32> -> vector<1x512xf32>
    %35 = arith.mulf %1, %34 : vector<1x512xf32>
    %c0_16 = arith.constant 0 : index
    %c0_17 = arith.constant 0 : index
    %c0_18 = arith.constant 0 : index
    %36 = vector.load %arg5[%c0_16, %c0_17, %c0_18] : memref<1x1x512xf32, #tpu.memory_space<vmem>>, vector<1x1x512xf32>
    %37 = vector.shape_cast %36 : vector<1x1x512xf32> to vector<1x512xf32>
    %38 = vector.shape_cast %35 : vector<1x512xf32> to vector<1x1x512xf32>
    tpu.vector_store %arg5[%c0_16, %c0_17, %c0_18], %38 {strides = array<i32>} : memref<1x1x512xf32, #tpu.memory_space<vmem>>, vector<1x1x512xf32>,
    return
  }
  func.func @transform_0(%arg0: i32) -> (i32, i32, i32) {
    %c0_i32 = arith.constant 0 : i32
    %c0_i32_0 = arith.constant 0 : i32
    %c0_i32_1 = arith.constant 0 : i32
    return %arg0, %c0_i32, %c0_i32_0 : i32, i32, i32
  }
  func.func @transform_1(%arg0: i32) -> (i32, i32) {
    %c0_i32 = arith.constant 0 : i32
    %c0_i32_0 = arith.constant 0 : i32
    %c0_i32_1 = arith.constant 0 : i32
    return %c0_i32, %c0_i32_0 : i32, i32
  }
  func.func @transform_2(%arg0: i32) -> (i32, i32) {
    %c0_i32 = arith.constant 0 : i32
    %c0_i32_0 = arith.constant 0 : i32
    %c0_i32_1 = arith.constant 0 : i32
    return %c0_i32, %c0_i32_0 : i32, i32
  }
  func.func @transform_3(%arg0: i32) -> (i32, i32) {
    %c0_i32 = arith.constant 0 : i32
    %c0_i32_0 = arith.constant 0 : i32
    %c0_i32_1 = arith.constant 0 : i32
    return %c0_i32, %c0_i32_0 : i32, i32
  }
  func.func @transform_4(%arg0: i32) -> (i32, i32, i32) {
    %c0_i32 = arith.constant 0 : i32
    %c0_i32_0 = arith.constant 0 : i32
    %c0_i32_1 = arith.constant 0 : i32
    return %arg0, %c0_i32, %c0_i32_0 : i32, i32, i32
  }
}

</mosaic_0001>

<llo_original>
// kernel: tpu_custom_call.1
$region0: #{tpu_custom_call.1}
  #allocation0 [shape = 'u32[]', space=smem, size = 0x4, offset = 0x4, fixed_abs, tag = 'smem constant byte address 0x4 - core index']
  #allocation1 [shape = 'u32[144,128]{1,0:T(1,128)}', space=vmem, size = 0x12000, scoped, tag = 'internal scratch']
  %s0 = inlined_call_operand.hbm [shape: f32[2,1,512], index: 0, kind: input, shape index: {}]
  %s1 = inlined_call_operand.vmem [shape: f32[2,32], index: 1, kind: input, shape index: {}]
  %s2 = inlined_call_operand.vmem [shape: f32[2,32], index: 2, kind: input, shape index: {}]
  %s3 = inlined_call_operand.hbm [shape: f32[32,512], index: 3, kind: input, shape index: {}]
  %s4 = inlined_call_operand.hbm [shape: f32[2,1,512], index: 4, kind: output, shape index: {}]
  %s5 = sld [smem:[#allocation0]]
  $region57: #{tpu_custom_call.1} parent=0
    _
  %s7 = ssub.s32 1, %s5
  %s8 = scalar_select 0, %s7, %s5
  $region1: #{tpu_custom_call.1} parent=0
    #allocation2 [shape = 'u8[4096]{0}', space=vmem, size = 0x1000, scoped, tag = 'input window, operand 0']
    #allocation3 [shape = 's32[2]{0}', space=sflag, size = 0x8, scoped, tag = 'scoped memory for tpu_custom_call.1']
    #allocation4 [shape = 's32[2]{0}', space=sflag, size = 0x8, scoped, tag = 'scoped memory for tpu_custom_call.1']
    #allocation5 [shape = 'u8[65536]{0}', space=vmem, size = 0x10000, scoped, tag = 'input window, operand 3, single buffered']
    #allocation6 [shape = 's32[1]{0}', space=sflag, size = 0x4, scoped, tag = 'scoped memory for tpu_custom_call.1']
    #allocation7 [shape = 'u8[4096]{0}', space=vmem, size = 0x1000, scoped, tag = 'output window, operand 0']
    %9 = vsyncpa [#allocation3], 0
    %s10 = scalar_lea.sflag [#allocation3], 1
    %11 = vsyncpa %s10, 0
    %12 = vsyncpa [#allocation6], 0
    %13 = vsyncpa [#allocation4], 0
    %s14 = scalar_lea.sflag [#allocation4], 1
    %15 = vsyncpa %s14, 0
    loop: start=0, step=1, limit=4
    $region2: #{tpu_custom_call.1} parent=1 // loop_pre_header
      _
    $region3: #{tpu_custom_call.1} parent=1 // loop_header
      %s17 = sphi 0, %s21
      %p18 = scmp.ge.s32.totalorder %s17, 4
      %s27 = sphi 0, %s29
      %s30 = sphi 0, %s27
      %s31 = sphi 0, %s30
      %s47 = sphi 0, %s31
      %s51 = sphi 0, %s51
      %s53 = sphi 0, %s51
      %s54 = sphi 0, %s53
      %s68 = sphi 0, %s54
      %s72 = sphi 0, %s72
      %s74 = sphi 0, %s72
      %s75 = sphi 0, %s74
      %s89 = sphi 0, %s75
      %s93 = sphi 0, %s93
      %s95 = sphi 0, %s93
      %s96 = sphi 0, %s95
      %s110 = sphi 0, %s96
      %s116 = sphi 0, %s118
      %s119 = sphi 0, %s116
      %s120 = sphi 0, %s119
      %s136 = sphi 0, %s120
    $region4: #{tpu_custom_call.1} parent=1 // loop_header_branch
      %20 = sbr.rel (%p18) target = $region8
    $region5: #{tpu_custom_call.1} parent=1 // loop_body
      %s22 = ssub.s32 %s17, 1
      %s23 = ssub.s32 %s17, 2
      %s24 = sadd.s32 %s17, 1
      %s25 = ssub.s32 %s17, %s24
      %p26 = scmp.eq.s32.totalorder %s25, 0
      %s28 = sadd.s32 %s27, 1
      %s29 = scalar_select %p26, %s27, %s28
      %p32 = pneg %p26
      %p33 = scmp.eq.s32.totalorder %s17, 1
      %p34 = por %p32, %p33
      %p35 = scmp.ne.s32.totalorder %s27, %s30
      %p36 = scmp.eq.s32.totalorder %s17, 0
      %p37 = por %p35, %p36
      %p38 = scmp.ne.s32.totalorder %s27, %s30
      %p39 = scmp.eq.s32.totalorder %s22, 1
      %p40 = por %p38, %p39
      %p41 = scmp.ne.s32.totalorder %s30, %s31
      %p42 = scmp.eq.s32.totalorder %s22, 0
      %p43 = por %p41, %p42
      %p44 = scmp.ne.s32.totalorder %s30, %s31
      %p45 = scmp.eq.s32.totalorder %s23, 1
      %p46 = por %p44, %p45
      %p48 = scmp.ne.s32.totalorder %s31, %s47
      %p49 = scmp.eq.s32.totalorder %s23, 0
      %p50 = por %p48, %p49
      %s52 = sadd.s32 %s51, 1
      %p55 = scmp.eq.s32.totalorder %s17, 1
      %p56 = scmp.ne.s32.totalorder %s51, %s53
      %p57 = scmp.eq.s32.totalorder %s17, 0
      %p58 = por %p56, %p57
      %p59 = scmp.ne.s32.totalorder %s51, %s53
      %p60 = scmp.eq.s32.totalorder %s22, 1
      %p61 = por %p59, %p60
      %p62 = scmp.ne.s32.totalorder %s53, %s54
      %p63 = scmp.eq.s32.totalorder %s22, 0
      %p64 = por %p62, %p63
      %p65 = scmp.ne.s32.totalorder %s53, %s54
      %p66 = scmp.eq.s32.totalorder %s23, 1
      %p67 = por %p65, %p66
      %p69 = scmp.ne.s32.totalorder %s54, %s68
      %p70 = scmp.eq.s32.totalorder %s23, 0
      %p71 = por %p69, %p70
      %s73 = sadd.s32 %s72, 1
      %p76 = scmp.eq.s32.totalorder %s17, 1
      %p77 = scmp.ne.s32.totalorder %s72, %s74
      %p78 = scmp.eq.s32.totalorder %s17, 0
      %p79 = por %p77, %p78
      %p80 = scmp.ne.s32.totalorder %s72, %s74
      %p81 = scmp.eq.s32.totalorder %s22, 1
      %p82 = por %p80, %p81
      %p83 = scmp.ne.s32.totalorder %s74, %s75
      %p84 = scmp.eq.s32.totalorder %s22, 0
      %p85 = por %p83, %p84
      %p86 = scmp.ne.s32.totalorder %s74, %s75
      %p87 = scmp.eq.s32.totalorder %s23, 1
      %p88 = por %p86, %p87
      %p90 = scmp.ne.s32.totalorder %s75, %s89
      %p91 = scmp.eq.s32.totalorder %s23, 0
      %p92 = por %p90, %p91
      %s94 = sadd.s32 %s93, 1
      %p97 = scmp.eq.s32.totalorder %s17, 1
      %p98 = scmp.ne.s32.totalorder %s93, %s95
      %p99 = scmp.eq.s32.totalorder %s17, 0
      %p100 = por %p98, %p99
      %p101 = scmp.ne.s32.totalorder %s93, %s95
      %p102 = scmp.eq.s32.totalorder %s22, 1
      %p103 = por %p101, %p102
      %p104 = scmp.ne.s32.totalorder %s95, %s96
      %p105 = scmp.eq.s32.totalorder %s22, 0
      %p106 = por %p104, %p105
      %p107 = scmp.ne.s32.totalorder %s95, %s96
      %p108 = scmp.eq.s32.totalorder %s23, 1
      %p109 = por %p107, %p108
      %p111 = scmp.ne.s32.totalorder %s96, %s110
      %p112 = scmp.eq.s32.totalorder %s23, 0
      %p113 = por %p111, %p112
      %s114 = ssub.s32 %s17, %s24
      %p115 = scmp.eq.s32.totalorder %s114, 0
      %s117 = sadd.s32 %s116, 1
      %s118 = scalar_select %p115, %s116, %s117
      %p121 = pneg %p115
      %p122 = scmp.eq.s32.totalorder %s17, 1
      %p123 = por %p121, %p122
      %p124 = scmp.ne.s32.totalorder %s116, %s119
      %p125 = scmp.eq.s32.totalorder %s17, 0
      %p126 = por %p124, %p125
      %p127 = scmp.ne.s32.totalorder %s116, %s119
      %p128 = scmp.eq.s32.totalorder %s22, 1
      %p129 = por %p127, %p128
      %p130 = scmp.ne.s32.totalorder %s119, %s120
      %p131 = scmp.eq.s32.totalorder %s22, 0
      %p132 = por %p130, %p131
      %p133 = scmp.ne.s32.totalorder %s119, %s120
      %p134 = scmp.eq.s32.totalorder %s23, 1
      %p135 = por %p133, %p134
      %p137 = scmp.ne.s32.totalorder %s120, %s136
      %p138 = scmp.eq.s32.totalorder %s23, 0
      %p139 = por %p137, %p138
      %p140 = scmp.le.s32.totalorder 1, %s17
      %p141 = scmp.lt.s32.totalorder %s17, 3
      %p142 = pnand %p140, %p141
      %p143 = pneg %p142
      // Predicated region
      $region9: #{tpu_custom_call.1} parent=5 // pred_check
        _
      $region10: #{tpu_custom_call.1} parent=5 // pred_check_branch
        %145 = sbr.rel (%p142) target = $region12
      $region11: #{tpu_custom_call.1} parent=5 // pred_region
        %s146 = ssub.s32 %s17, 1
        // Predicated region
        $region13: #{tpu_custom_call.1} parent=11 // pred_check
          %p147 = pneg %p64
        $region14: #{tpu_custom_call.1} parent=11 // pred_check_branch
          %149 = sbr.rel (%p147) target = $region16
        $region15: #{tpu_custom_call.1} parent=11 // pred_region
          _
        $region16: #{tpu_custom_call.1} parent=11 // pred_fallthru
          _
        // Predicated region
        $region17: #{tpu_custom_call.1} parent=11 // pred_check
          %p150 = pneg %p85
        $region18: #{tpu_custom_call.1} parent=11 // pred_check_branch
          %152 = sbr.rel (%p150) target = $region20
        $region19: #{tpu_custom_call.1} parent=11 // pred_region
          _
        $region20: #{tpu_custom_call.1} parent=11 // pred_fallthru
          _
        // Predicated region
        $region21: #{tpu_custom_call.1} parent=11 // pred_check
          %p153 = pneg %p106
        $region22: #{tpu_custom_call.1} parent=11 // pred_check_branch
          %155 = sbr.rel (%p153) target = $region24
        $region23: #{tpu_custom_call.1} parent=11 // pred_region
          %s157 = ssub.s32 2048, 2048
          %158 = vsyncadd [#allocation6], %s157
          %s159 = sshll.u32 [#allocation5], 4
          %s160 = int_to_ptr.vmem [resolvable:$true] %s159
          %165 = dma.hbm_to_vmem [thread:$0]  %s3, 2048, %s160, [#allocation6], 512, 512, 32
        $region24: #{tpu_custom_call.1} parent=11 // pred_fallthru
          _
      $region12: #{tpu_custom_call.1} parent=5 // pred_fallthru
        _
      %p166 = scmp.lt.s32.totalorder %s17, 2
      // Predicated region
      $region25: #{tpu_custom_call.1} parent=5 // pred_check
        %p167 = pneg %p166
      $region26: #{tpu_custom_call.1} parent=5 // pred_check_branch
        %169 = sbr.rel (%p167) target = $region28
      $region27: #{tpu_custom_call.1} parent=5 // pred_region
        // Predicated region
        $region29: #{tpu_custom_call.1} parent=27 // pred_check
          %p170 = pneg %p37
        $region30: #{tpu_custom_call.1} parent=27 // pred_check_branch
          %172 = sbr.rel (%p170) target = $region32
        $region31: #{tpu_custom_call.1} parent=27 // pred_region
          %s173 = sand.u32 %s27, 1
          %s174 = scalar_lea.sflag [#allocation3], %s173
          %s175 = sand.u32 %s27, 1
          %s176 = smul.addr %s175, 4
          %s177 = scalar_lea.vmem [#allocation2], %s176
          %s179 = ssub.s32 64, 64
          %180 = vsyncadd %s174, %s179
          %s181 = smul.addr %s17, 4
          %s182 = smul.addr %s181, 16
          %s183 = scalar_lea.hbm %s0, %s182
          %s185 = sshll.u32 %s177, 4
          %s186 = int_to_ptr.vmem [resolvable:$true] %s185
          %188 = dma.hbm_to_vmem [thread:$0]  %s183, 64, %s186, %s174
        $region32: #{tpu_custom_call.1} parent=27 // pred_fallthru
          _
      $region28: #{tpu_custom_call.1} parent=5 // pred_fallthru
        _
      %p189 = scmp.le.s32.totalorder 1, %s17
      %p190 = scmp.lt.s32.totalorder %s17, 3
      %p191 = pnand %p189, %p190
      %p192 = pneg %p191
      // Predicated region
      $region33: #{tpu_custom_call.1} parent=5 // pred_check
        _
      $region34: #{tpu_custom_call.1} parent=5 // pred_check_branch
        %194 = sbr.rel (%p191) target = $region36
      $region35: #{tpu_custom_call.1} parent=5 // pred_region
        %s195 = ssub.s32 %s17, 1
        %s196 = sand.u32 %s30, 1
        %s197 = scalar_lea.sflag [#allocation3], %s196
        %s198 = sand.u32 %s30, 1
        %s199 = smul.addr %s198, 4
        %s200 = scalar_lea.vmem [#allocation2], %s199
        // Predicated region
        $region37: #{tpu_custom_call.1} parent=35 // pred_check
          %p201 = pneg %p43
        $region38: #{tpu_custom_call.1} parent=35 // pred_check_branch
          %203 = sbr.rel (%p201) target = $region40
        $region39: #{tpu_custom_call.1} parent=35 // pred_region
          %204 = dma.done %s197, 64
        $region40: #{tpu_custom_call.1} parent=35 // pred_fallthru
          _
        // Predicated region
        $region41: #{tpu_custom_call.1} parent=35 // pred_check
          %p205 = pneg %p106
        $region42: #{tpu_custom_call.1} parent=35 // pred_check_branch
          %207 = sbr.rel (%p205) target = $region44
        $region43: #{tpu_custom_call.1} parent=35 // pred_region
          %208 = dma.done [#allocation6], 2048
        $region44: #{tpu_custom_call.1} parent=35 // pred_fallthru
          _
        %s209 = sand.u32 %s30, 1
        %s210 = scalar_lea.sflag [#allocation3], %s209
        %s211 = sand.u32 %s30, 1
        %s212 = smul.addr %s211, 4
        %s213 = scalar_lea.vmem [#allocation2], %s212
        %p214 = pneg %p43
        %p215 = pneg %p40
        %p216 = pneg %p64
        %p217 = pneg %p61
        %p218 = pneg %p85
        %p219 = pneg %p82
        %p220 = pneg %p106
        %p221 = pneg %p103
        %p222 = pneg %p132
        %p223 = pneg %p129
        %s224 = sand.u32 %s119, 1
        %s225 = scalar_lea.sflag [#allocation4], %s224
        %s226 = sand.u32 %s119, 1
        %s227 = smul.addr %s226, 4
        %s228 = scalar_lea.vmem [#allocation7], %s227
        %v229 = vld [vmem:[%s200] sm:$0xf]
        %v230 = vld [vmem:[#allocation5] sm:$0xff]
        %v231 = vld [vmem:[#allocation5 + $0x8] sm:$0xff]
        %v232 = vld [vmem:[#allocation5 + $0x10] sm:$0xff]
        %v233 = vld [vmem:[#allocation5 + $0x18] sm:$0xff]
        %v234 = vld [vmem:[#allocation5 + $0x20] sm:$0xff]
        %v235 = vld [vmem:[#allocation5 + $0x28] sm:$0xff]
        %v236 = vld [vmem:[#allocation5 + $0x30] sm:$0xff]
        %v237 = vld [vmem:[#allocation5 + $0x38] sm:$0xff]
        %v238 = vld [vmem:[#allocation5 + $0x40] sm:$0xff]
        %v239 = vld [vmem:[#allocation5 + $0x48] sm:$0xff]
        %v240 = vld [vmem:[#allocation5 + $0x50] sm:$0xff]
        %v241 = vld [vmem:[#allocation5 + $0x58] sm:$0xff]
        %v242 = vld [vmem:[#allocation5 + $0x60] sm:$0xff]
        %v243 = vld [vmem:[#allocation5 + $0x68] sm:$0xff]
        %v244 = vld [vmem:[#allocation5 + $0x70] sm:$0xff]
        %v245 = vld [vmem:[#allocation5 + $0x78] sm:$0xff]
        %v247 = vlaneseq
        %v248 = vshrl.u32 %v247, 7
        %v249 = vsub.s32 0, %v248
        %v250 = vrot.slane %v229, %v249
        %v251 = vlaneseq
        %v252 = vshrl.u32 %v251, 7
        %v253 = vsub.s32 1, %v252
        %v254 = vrot.slane %v229, %v253
        %v255 = vlaneseq
        %v256 = vshrl.u32 %v255, 7
        %v257 = vsub.s32 2, %v256
        %v258 = vrot.slane %v229, %v257
        %v259 = vlaneseq
        %v260 = vshrl.u32 %v259, 7
        %v261 = vsub.s32 3, %v260
        %v262 = vrot.slane %v229, %v261
        %v267 = vand.u32 %v231, 4294901760
        %268 = vmatprep.subr.mxu0 %v267
        %v269 = vand.u32 %v230, 4294901760
        %270 = vmatpush1.xpose.msra.mxu0 %v269
        %v271 = vand.u32 %v235, 4294901760
        %272 = vmatprep.subr.mxu0 %v271
        %v273 = vand.u32 %v234, 4294901760
        %274 = vmatpush1.xpose.msra.mxu0 %v273
        %v275 = vand.u32 %v239, 4294901760
        %276 = vmatprep.subr.mxu0 %v275
        %v277 = vand.u32 %v238, 4294901760
        %278 = vmatpush1.xpose.msra.mxu0 %v277
        %v279 = vand.u32 %v243, 4294901760
        %280 = vmatprep.subr.mxu0 %v279
        %v281 = vand.u32 %v242, 4294901760
        %282 = vmatpush1.xpose.msra.mxu0 %v281
        %283 = vmatprep.subr.mxu0 0.0
        %284 = vmatpush1.xpose.msra.mxu0 0.0
        %285 = vmatprep.subr.mxu0 0.0
        %286 = vmatpush1.xpose.msra.mxu0 0.0
        %287 = vmatprep.subr.mxu0 0.0
        %288 = vmatpush1.xpose.msra.mxu0 0.0
        %289 = vmatprep.subr.mxu0 0.0
        %290 = vmatpush1.xpose.msra.mxu0 0.0
        %291 = vmatprep.subr.mxu0 0.0
        %292 = vmatpush1.xpose.msra.mxu0 0.0
        %293 = vmatprep.subr.mxu0 0.0
        %294 = vmatpush1.xpose.msra.mxu0 0.0
        %295 = vmatprep.subr.mxu0 0.0
        %296 = vmatpush1.xpose.msra.mxu0 0.0
        %297 = vmatprep.subr.mxu0 0.0
        %298 = vmatpush1.xpose.msra.mxu0 0.0
        %299 = vmatprep.subr.mxu0 0.0
        %300 = vmatpush1.xpose.msra.mxu0 0.0
        %301 = vmatprep.subr.mxu0 0.0
        %302 = vmatpush1.xpose.msra.mxu0 0.0
        %303 = vmatprep.subr.mxu0 0.0
        %304 = vmatpush1.xpose.msra.mxu0 0.0
        %305 = vmatprep.subr.mxu0 0.0
        %306 = vmatpush1.xpose.msra.mxu0 0.0
        %307 = vmatprep.subr.mxu0 0.0
        %308 = vmatpush1.xpose.msra.mxu0 0.0
        %309 = vmatprep.subr.mxu0 0.0
        %310 = vmatpush1.xpose.msra.mxu0 0.0
        %311 = vmatprep.subr.mxu0 0.0
        %312 = vmatpush1.xpose.msra.mxu0 0.0
        %313 = vmatprep.subr.mxu0 0.0
        %314 = vmatpush1.xpose.msra.mxu0 0.0
        %315 = vmatprep.subr.mxu0 0.0
        %316 = vmatpush1.xpose.msra.mxu0 0.0
        %317 = vmatprep.subr.mxu0 0.0
        %318 = vmatpush1.xpose.msra.mxu0 0.0
        %319 = vmatprep.subr.mxu0 0.0
        %320 = vmatpush1.xpose.msra.mxu0 0.0
        %321 = vmatprep.subr.mxu0 0.0
        %322 = vmatpush1.xpose.msra.mxu0 0.0
        %323 = vmatprep.subr.mxu0 0.0
        %324 = vmatpush1.xpose.msra.mxu0 0.0
        %325 = vmatprep.subr.mxu0 0.0
        %326 = vmatpush1.xpose.msra.mxu0 0.0
        %327 = vmatprep.subr.mxu0 0.0
        %328 = vmatpush1.xpose.msra.mxu0 0.0
        %329 = vmatprep.subr.mxu0 0.0
        %330 = vmatpush1.xpose.msra.mxu0 0.0
        %331 = vmatprep.subr.mxu0 0.0
        %332 = vmatpush1.xpose.msra.mxu0 0.0
        %333 = vmatprep.subr.mxu0 0.0
        %334 = vmatpush1.xpose.msra.mxu0 0.0
        %335 = vmatprep.subr.mxu0 0.0
        %336 = vmatpush1.xpose.msra.mxu0 0.0
        %337 = vmatprep.subr.mxu0 0.0
        %338 = vmatpush1.xpose.msra.mxu0 0.0
        %v339 = vand.u32 %v254, 4294901760
        %v340 = vsub.f32 %v254, %v339
        %v341 = vand.u32 %v340, 4294901760
        %v342 = vsub.f32 %v340, %v341
        %v343 = vand.u32 %v342, 4294901760
        %344 = vmatprep.mubr.f32.mxu0 %v343
        %v345 = vand.u32 %v250, 4294901760
        %v346 = vsub.f32 %v250, %v345
        %v347 = vand.u32 %v346, 4294901760
        %v348 = vsub.f32 %v346, %v347
        %v349 = vand.u32 %v348, 4294901760
        %350 = vmatmul.mubr.f32.gmra.mrb[0].mxu0 %v349
        %v351 = vpop.f32.mrb[0].mxu0
        %v352 = vadd.f32 0.0, %v351
        %v353 = vpop.f32.mrb[0].mxu0
        %354 = vdwg.mxu0
        %v355 = vand.u32 %v231, 4294901760
        %v356 = vsub.f32 %v231, %v355
        %v357 = vand.u32 %v356, 4294901760
        %v358 = vsub.f32 %v356, %v357
        %v359 = vand.u32 %v358, 4294901760
        %360 = vmatprep.subr.mxu0 %v359
        %v361 = vand.u32 %v230, 4294901760
        %v362 = vsub.f32 %v230, %v361
        %v363 = vand.u32 %v362, 4294901760
        %v364 = vsub.f32 %v362, %v363
        %v365 = vand.u32 %v364, 4294901760
        %366 = vmatpush1.xpose.msra.mxu0 %v365
        %v367 = vand.u32 %v235, 4294901760
        %v368 = vsub.f32 %v235, %v367
        %v369 = vand.u32 %v368, 4294901760
        %v370 = vsub.f32 %v368, %v369
        %v371 = vand.u32 %v370, 4294901760
        %372 = vmatprep.subr.mxu0 %v371
        %v373 = vand.u32 %v234, 4294901760
        %v374 = vsub.f32 %v234, %v373
        %v375 = vand.u32 %v374, 4294901760
        %v376 = vsub.f32 %v374, %v375
        %v377 = vand.u32 %v376, 4294901760
        %378 = vmatpush1.xpose.msra.mxu0 %v377
        %v379 = vand.u32 %v239, 4294901760
        %v380 = vsub.f32 %v239, %v379
        %v381 = vand.u32 %v380, 4294901760
        %v382 = vsub.f32 %v380, %v381
        %v383 = vand.u32 %v382, 4294901760
        %384 = vmatprep.subr.mxu0 %v383
        %v385 = vand.u32 %v238, 4294901760
        %v386 = vsub.f32 %v238, %v385
        %v387 = vand.u32 %v386, 4294901760
        %v388 = vsub.f32 %v386, %v387
        %v389 = vand.u32 %v388, 4294901760
        %390 = vmatpush1.xpose.msra.mxu0 %v389
        %v391 = vand.u32 %v243, 4294901760
        %v392 = vsub.f32 %v243, %v391
        %v393 = vand.u32 %v392, 4294901760
        %v394 = vsub.f32 %v392, %v393
        %v395 = vand.u32 %v394, 4294901760
        %396 = vmatprep.subr.mxu0 %v395
        %v397 = vand.u32 %v242, 4294901760
        %v398 = vsub.f32 %v242, %v397
        %v399 = vand.u32 %v398, 4294901760
        %v400 = vsub.f32 %v398, %v399
        %v401 = vand.u32 %v400, 4294901760
        %402 = vmatpush1.xpose.msra.mxu0 %v401
        %403 = vmatprep.subr.mxu0 0.0
        %404 = vmatpush1.xpose.msra.mxu0 0.0
        %405 = vmatprep.subr.mxu0 0.0
        %406 = vmatpush1.xpose.msra.mxu0 0.0
        %407 = vmatprep.subr.mxu0 0.0
        %408 = vmatpush1.xpose.msra.mxu0 0.0
        %409 = vmatprep.subr.mxu0 0.0
        %410 = vmatpush1.xpose.msra.mxu0 0.0
        %411 = vmatprep.subr.mxu0 0.0
        %412 = vmatpush1.xpose.msra.mxu0 0.0
        %413 = vmatprep.subr.mxu0 0.0
        %414 = vmatpush1.xpose.msra.mxu0 0.0
        %415 = vmatprep.subr.mxu0 0.0
        %416 = vmatpush1.xpose.msra.mxu0 0.0
        %417 = vmatprep.subr.mxu0 0.0
        %418 = vmatpush1.xpose.msra.mxu0 0.0
        %419 = vmatprep.subr.mxu0 0.0
        %420 = vmatpush1.xpose.msra.mxu0 0.0
        %421 = vmatprep.subr.mxu0 0.0
        %422 = vmatpush1.xpose.msra.mxu0 0.0
        %423 = vmatprep.subr.mxu0 0.0
        %424 = vmatpush1.xpose.msra.mxu0 0.0
        %425 = vmatprep.subr.mxu0 0.0
        %426 = vmatpush1.xpose.msra.mxu0 0.0
        %427 = vmatprep.subr.mxu0 0.0
        %428 = vmatpush1.xpose.msra.mxu0 0.0
        %429 = vmatprep.subr.mxu0 0.0
        %430 = vmatpush1.xpose.msra.mxu0 0.0
        %431 = vmatprep.subr.mxu0 0.0
        %432 = vmatpush1.xpose.msra.mxu0 0.0
        %433 = vmatprep.subr.mxu0 0.0
        %434 = vmatpush1.xpose.msra.mxu0 0.0
        %435 = vmatprep.subr.mxu0 0.0
        %436 = vmatpush1.xpose.msra.mxu0 0.0
        %437 = vmatprep.subr.mxu0 0.0
        %438 = vmatpush1.xpose.msra.mxu0 0.0
        %439 = vmatprep.subr.mxu0 0.0
        %440 = vmatpush1.xpose.msra.mxu0 0.0
        %441 = vmatprep.subr.mxu0 0.0
        %442 = vmatpush1.xpose.msra.mxu0 0.0
        %443 = vmatprep.subr.mxu0 0.0
        %444 = vmatpush1.xpose.msra.mxu0 0.0
        %445 = vmatprep.subr.mxu0 0.0
        %446 = vmatpush1.xpose.msra.mxu0 0.0
        %447 = vmatprep.subr.mxu0 0.0
        %448 = vmatpush1.xpose.msra.mxu0 0.0
        %449 = vmatprep.subr.mxu0 0.0
        %450 = vmatpush1.xpose.msra.mxu0 0.0
        %451 = vmatprep.subr.mxu0 0.0
        %452 = vmatpush1.xpose.msra.mxu0 0.0
        %453 = vmatprep.subr.mxu0 0.0
        %454 = vmatpush1.xpose.msra.mxu0 0.0
        %455 = vmatprep.subr.mxu0 0.0
        %456 = vmatpush1.xpose.msra.mxu0 0.0
        %457 = vmatprep.subr.mxu0 0.0
        %458 = vmatpush1.xpose.msra.mxu0 0.0
        %v459 = vand.u32 %v254, 4294901760
        %460 = vmatprep.mubr.f32.mxu0 %v459
        %v461 = vand.u32 %v250, 4294901760
        %462 = vmatmul.mubr.f32.gmra.mrb[0].mxu0 %v461
        %v463 = vpop.f32.mrb[0].mxu0
        %v464 = vadd.f32 %v352, %v463
        %v465 = vpop.f32.mrb[0].mxu0
        %466 = vdwg.mxu0
        %v467 = vand.u32 %v231, 4294901760
        %v468 = vsub.f32 %v231, %v467
        %469 = vmatprep.subr.mxu0 %v468
        %v470 = vand.u32 %v230, 4294901760
        %v471 = vsub.f32 %v230, %v470
        %472 = vmatpush1.xpose.msra.mxu0 %v471
        %v473 = vand.u32 %v235, 4294901760
        %v474 = vsub.f32 %v235, %v473
        %475 = vmatprep.subr.mxu0 %v474
        %v476 = vand.u32 %v234, 4294901760
        %v477 = vsub.f32 %v234, %v476
        %478 = vmatpush1.xpose.msra.mxu0 %v477
        %v479 = vand.u32 %v239, 4294901760
        %v480 = vsub.f32 %v239, %v479
        %481 = vmatprep.subr.mxu0 %v480
        %v482 = vand.u32 %v238, 4294901760
        %v483 = vsub.f32 %v238, %v482
        %484 = vmatpush1.xpose.msra.mxu0 %v483
        %v485 = vand.u32 %v243, 4294901760
        %v486 = vsub.f32 %v243, %v485
        %487 = vmatprep.subr.mxu0 %v486
        %v488 = vand.u32 %v242, 4294901760
        %v489 = vsub.f32 %v242, %v488
        %490 = vmatpush1.xpose.msra.mxu0 %v489
        %491 = vmatprep.subr.mxu0 0.0
        %492 = vmatpush1.xpose.msra.mxu0 0.0
        %493 = vmatprep.subr.mxu0 0.0
        %494 = vmatpush1.xpose.msra.mxu0 0.0
        %495 = vmatprep.subr.mxu0 0.0
        %496 = vmatpush1.xpose.msra.mxu0 0.0
        %497 = vmatprep.subr.mxu0 0.0
        %498 = vmatpush1.xpose.msra.mxu0 0.0
        %499 = vmatprep.subr.mxu0 0.0
        %500 = vmatpush1.xpose.msra.mxu0 0.0
        %501 = vmatprep.subr.mxu0 0.0
        %502 = vmatpush1.xpose.msra.mxu0 0.0
        %503 = vmatprep.subr.mxu0 0.0
        %504 = vmatpush1.xpose.msra.mxu0 0.0
        %505 = vmatprep.subr.mxu0 0.0
        %506 = vmatpush1.xpose.msra.mxu0 0.0
        %507 = vmatprep.subr.mxu0 0.0
        %508 = vmatpush1.xpose.msra.mxu0 0.0
        %509 = vmatprep.subr.mxu0 0.0
        %510 = vmatpush1.xpose.msra.mxu0 0.0
        %511 = vmatprep.subr.mxu0 0.0
        %512 = vmatpush1.xpose.msra.mxu0 0.0
        %513 = vmatprep.subr.mxu0 0.0
        %514 = vmatpush1.xpose.msra.mxu0 0.0
        %515 = vmatprep.subr.mxu0 0.0
        %516 = vmatpush1.xpose.msra.mxu0 0.0
        %517 = vmatprep.subr.mxu0 0.0
        %518 = vmatpush1.xpose.msra.mxu0 0.0
        %519 = vmatprep.subr.mxu0 0.0
        %520 = vmatpush1.xpose.msra.mxu0 0.0
        %521 = vmatprep.subr.mxu0 0.0
        %522 = vmatpush1.xpose.msra.mxu0 0.0
        %523 = vmatprep.subr.mxu0 0.0
        %524 = vmatpush1.xpose.msra.mxu0 0.0
        %525 = vmatprep.subr.mxu0 0.0
        %526 = vmatpush1.xpose.msra.mxu0 0.0
        %527 = vmatprep.subr.mxu0 0.0
        %528 = vmatpush1.xpose.msra.mxu0 0.0
        %529 = vmatprep.subr.mxu0 0.0
        %530 = vmatpush1.xpose.msra.mxu0 0.0
        %531 = vmatprep.subr.mxu0 0.0
        %532 = vmatpush1.xpose.msra.mxu0 0.0
        %533 = vmatprep.subr.mxu0 0.0
        %534 = vmatpush1.xpose.msra.mxu0 0.0
        %535 = vmatprep.subr.mxu0 0.0
        %536 = vmatpush1.xpose.msra.mxu0 0.0
        %537 = vmatprep.subr.mxu0 0.0
        %538 = vmatpush1.xpose.msra.mxu0 0.0
        %539 = vmatprep.subr.mxu0 0.0
        %540 = vmatpush1.xpose.msra.mxu0 0.0
        %541 = vmatprep.subr.mxu0 0.0
        %542 = vmatpush1.xpose.msra.mxu0 0.0
        %543 = vmatprep.subr.mxu0 0.0
        %544 = vmatpush1.xpose.msra.mxu0 0.0
        %545 = vmatprep.subr.mxu0 0.0
        %546 = vmatpush1.xpose.msra.mxu0 0.0
        %v547 = vand.u32 %v254, 4294901760
        %v548 = vsub.f32 %v254, %v547
        %549 = vmatprep.mubr.f32.mxu0 %v548
        %v550 = vand.u32 %v250, 4294901760
        %v551 = vsub.f32 %v250, %v550
        %552 = vmatmul.mubr.f32.gmra.mrb[0].mxu0 %v551
        %v553 = vpop.f32.mrb[0].mxu0
        %v554 = vadd.f32 %v464, %v553
        %v555 = vpop.f32.mrb[0].mxu0
        %556 = vdwg.mxu0
        %v557 = vand.u32 %v231, 4294901760
        %558 = vmatprep.subr.mxu0 %v557
        %v559 = vand.u32 %v230, 4294901760
        %560 = vmatpush1.xpose.msra.mxu0 %v559
        %v561 = vand.u32 %v235, 4294901760
        %562 = vmatprep.subr.mxu0 %v561
        %v563 = vand.u32 %v234, 4294901760
        %564 = vmatpush1.xpose.msra.mxu0 %v563
        %v565 = vand.u32 %v239, 4294901760
        %566 = vmatprep.subr.mxu0 %v565
        %v567 = vand.u32 %v238, 4294901760
        %568 = vmatpush1.xpose.msra.mxu0 %v567
        %v569 = vand.u32 %v243, 4294901760
        %570 = vmatprep.subr.mxu0 %v569
        %v571 = vand.u32 %v242, 4294901760
        %572 = vmatpush1.xpose.msra.mxu0 %v571
        %573 = vmatprep.subr.mxu0 0.0
        %574 = vmatpush1.xpose.msra.mxu0 0.0
        %575 = vmatprep.subr.mxu0 0.0
        %576 = vmatpush1.xpose.msra.mxu0 0.0
        %577 = vmatprep.subr.mxu0 0.0
        %578 = vmatpush1.xpose.msra.mxu0 0.0
        %579 = vmatprep.subr.mxu0 0.0
        %580 = vmatpush1.xpose.msra.mxu0 0.0
        %581 = vmatprep.subr.mxu0 0.0
        %582 = vmatpush1.xpose.msra.mxu0 0.0
        %583 = vmatprep.subr.mxu0 0.0
        %584 = vmatpush1.xpose.msra.mxu0 0.0
        %585 = vmatprep.subr.mxu0 0.0
        %586 = vmatpush1.xpose.msra.mxu0 0.0
        %587 = vmatprep.subr.mxu0 0.0
        %588 = vmatpush1.xpose.msra.mxu0 0.0
        %589 = vmatprep.subr.mxu0 0.0
        %590 = vmatpush1.xpose.msra.mxu0 0.0
        %591 = vmatprep.subr.mxu0 0.0
        %592 = vmatpush1.xpose.msra.mxu0 0.0
        %593 = vmatprep.subr.mxu0 0.0
        %594 = vmatpush1.xpose.msra.mxu0 0.0
        %595 = vmatprep.subr.mxu0 0.0
        %596 = vmatpush1.xpose.msra.mxu0 0.0
        %597 = vmatprep.subr.mxu0 0.0
        %598 = vmatpush1.xpose.msra.mxu0 0.0
        %599 = vmatprep.subr.mxu0 0.0
        %600 = vmatpush1.xpose.msra.mxu0 0.0
        %601 = vmatprep.subr.mxu0 0.0
        %602 = vmatpush1.xpose.msra.mxu0 0.0
        %603 = vmatprep.subr.mxu0 0.0
        %604 = vmatpush1.xpose.msra.mxu0 0.0
        %605 = vmatprep.subr.mxu0 0.0
        %606 = vmatpush1.xpose.msra.mxu0 0.0
        %607 = vmatprep.subr.mxu0 0.0
        %608 = vmatpush1.xpose.msra.mxu0 0.0
        %609 = vmatprep.subr.mxu0 0.0
        %610 = vmatpush1.xpose.msra.mxu0 0.0
        %611 = vmatprep.subr.mxu0 0.0
        %612 = vmatpush1.xpose.msra.mxu0 0.0
        %613 = vmatprep.subr.mxu0 0.0
        %614 = vmatpush1.xpose.msra.mxu0 0.0
        %615 = vmatprep.subr.mxu0 0.0
        %616 = vmatpush1.xpose.msra.mxu0 0.0
        %617 = vmatprep.subr.mxu0 0.0
        %618 = vmatpush1.xpose.msra.mxu0 0.0
        %619 = vmatprep.subr.mxu0 0.0
        %620 = vmatpush1.xpose.msra.mxu0 0.0
        %621 = vmatprep.subr.mxu0 0.0
        %622 = vmatpush1.xpose.msra.mxu0 0.0
        %623 = vmatprep.subr.mxu0 0.0
        %624 = vmatpush1.xpose.msra.mxu0 0.0
        %625 = vmatprep.subr.mxu0 0.0
        %626 = vmatpush1.xpose.msra.mxu0 0.0
        %627 = vmatprep.subr.mxu0 0.0
        %628 = vmatpush1.xpose.msra.mxu0 0.0
        %v629 = vand.u32 %v254, 4294901760
        %v630 = vsub.f32 %v254, %v629
        %v631 = vand.u32 %v630, 4294901760
        %632 = vmatprep.mubr.f32.mxu0 %v631
        %v633 = vand.u32 %v250, 4294901760
        %v634 = vsub.f32 %v250, %v633
        %v635 = vand.u32 %v634, 4294901760
        %636 = vmatmul.mubr.f32.gmra.mrb[0].mxu0 %v635
        %v637 = vpop.f32.mrb[0].mxu0
        %v638 = vadd.f32 %v554, %v637
        %v639 = vpop.f32.mrb[0].mxu0
        %640 = vdwg.mxu0
        %v641 = vand.u32 %v231, 4294901760
        %v642 = vsub.f32 %v231, %v641
        %v643 = vand.u32 %v642, 4294901760
        %644 = vmatprep.subr.mxu0 %v643
        %v645 = vand.u32 %v230, 4294901760
        %v646 = vsub.f32 %v230, %v645
        %v647 = vand.u32 %v646, 4294901760
        %648 = vmatpush1.xpose.msra.mxu0 %v647
        %v649 = vand.u32 %v235, 4294901760
        %v650 = vsub.f32 %v235, %v649
        %v651 = vand.u32 %v650, 4294901760
        %652 = vmatprep.subr.mxu0 %v651
        %v653 = vand.u32 %v234, 4294901760
        %v654 = vsub.f32 %v234, %v653
        %v655 = vand.u32 %v654, 4294901760
        %656 = vmatpush1.xpose.msra.mxu0 %v655
        %v657 = vand.u32 %v239, 4294901760
        %v658 = vsub.f32 %v239, %v657
        %v659 = vand.u32 %v658, 4294901760
        %660 = vmatprep.subr.mxu0 %v659
        %v661 = vand.u32 %v238, 4294901760
        %v662 = vsub.f32 %v238, %v661
        %v663 = vand.u32 %v662, 4294901760
        %664 = vmatpush1.xpose.msra.mxu0 %v663
        %v665 = vand.u32 %v243, 4294901760
        %v666 = vsub.f32 %v243, %v665
        %v667 = vand.u32 %v666, 4294901760
        %668 = vmatprep.subr.mxu0 %v667
        %v669 = vand.u32 %v242, 4294901760
        %v670 = vsub.f32 %v242, %v669
        %v671 = vand.u32 %v670, 4294901760
        %672 = vmatpush1.xpose.msra.mxu0 %v671
        %673 = vmatprep.subr.mxu0 0.0
        %674 = vmatpush1.xpose.msra.mxu0 0.0
        %675 = vmatprep.subr.mxu0 0.0
        %676 = vmatpush1.xpose.msra.mxu0 0.0
        %677 = vmatprep.subr.mxu0 0.0
        %678 = vmatpush1.xpose.msra.mxu0 0.0
        %679 = vmatprep.subr.mxu0 0.0
        %680 = vmatpush1.xpose.msra.mxu0 0.0
        %681 = vmatprep.subr.mxu0 0.0
        %682 = vmatpush1.xpose.msra.mxu0 0.0
        %683 = vmatprep.subr.mxu0 0.0
        %684 = vmatpush1.xpose.msra.mxu0 0.0
        %685 = vmatprep.subr.mxu0 0.0
        %686 = vmatpush1.xpose.msra.mxu0 0.0
        %687 = vmatprep.subr.mxu0 0.0
        %688 = vmatpush1.xpose.msra.mxu0 0.0
        %689 = vmatprep.subr.mxu0 0.0
        %690 = vmatpush1.xpose.msra.mxu0 0.0
        %691 = vmatprep.subr.mxu0 0.0
        %692 = vmatpush1.xpose.msra.mxu0 0.0
        %693 = vmatprep.subr.mxu0 0.0
        %694 = vmatpush1.xpose.msra.mxu0 0.0
        %695 = vmatprep.subr.mxu0 0.0
        %696 = vmatpush1.xpose.msra.mxu0 0.0
        %697 = vmatprep.subr.mxu0 0.0
        %698 = vmatpush1.xpose.msra.mxu0 0.0
        %699 = vmatprep.subr.mxu0 0.0
        %700 = vmatpush1.xpose.msra.mxu0 0.0
        %701 = vmatprep.subr.mxu0 0.0
        %702 = vmatpush1.xpose.msra.mxu0 0.0
        %703 = vmatprep.subr.mxu0 0.0
        %704 = vmatpush1.xpose.msra.mxu0 0.0
        %705 = vmatprep.subr.mxu0 0.0
        %706 = vmatpush1.xpose.msra.mxu0 0.0
        %707 = vmatprep.subr.mxu0 0.0
        %708 = vmatpush1.xpose.msra.mxu0 0.0
        %709 = vmatprep.subr.mxu0 0.0
        %710 = vmatpush1.xpose.msra.mxu0 0.0
        %711 = vmatprep.subr.mxu0 0.0
        %712 = vmatpush1.xpose.msra.mxu0 0.0
        %713 = vmatprep.subr.mxu0 0.0
        %714 = vmatpush1.xpose.msra.mxu0 0.0
        %715 = vmatprep.subr.mxu0 0.0
        %716 = vmatpush1.xpose.msra.mxu0 0.0
        %717 = vmatprep.subr.mxu0 0.0
        %718 = vmatpush1.xpose.msra.mxu0 0.0
        %719 = vmatprep.subr.mxu0 0.0
        %720 = vmatpush1.xpose.msra.mxu0 0.0
        %721 = vmatprep.subr.mxu0 0.0
        %722 = vmatpush1.xpose.msra.mxu0 0.0
        %723 = vmatprep.subr.mxu0 0.0
        %724 = vmatpush1.xpose.msra.mxu0 0.0
        %725 = vmatprep.subr.mxu0 0.0
        %726 = vmatpush1.xpose.msra.mxu0 0.0
        %727 = vmatprep.subr.mxu0 0.0
        %728 = vmatpush1.xpose.msra.mxu0 0.0
        %v729 = vand.u32 %v254, 4294901760
        %730 = vmatprep.mubr.f32.mxu0 %v729
        %v731 = vand.u32 %v250, 4294901760
        %732 = vmatmul.mubr.f32.gmra.mrb[0].mxu0 %v731
        %v733 = vpop.f32.mrb[0].mxu0
        %v734 = vadd.f32 %v638, %v733
        %v735 = vpop.f32.mrb[0].mxu0
        %736 = vdwg.mxu0
        %v737 = vand.u32 %v231, 4294901760
        %738 = vmatprep.subr.mxu0 %v737
        %v739 = vand.u32 %v230, 4294901760
        %740 = vmatpush1.xpose.msra.mxu0 %v739
        %v741 = vand.u32 %v235, 4294901760
        %742 = vmatprep.subr.mxu0 %v741
        %v743 = vand.u32 %v234, 4294901760
        %744 = vmatpush1.xpose.msra.mxu0 %v743
        %v745 = vand.u32 %v239, 4294901760
        %746 = vmatprep.subr.mxu0 %v745
        %v747 = vand.u32 %v238, 4294901760
        %748 = vmatpush1.xpose.msra.mxu0 %v747
        %v749 = vand.u32 %v243, 4294901760
        %750 = vmatprep.subr.mxu0 %v749
        %v751 = vand.u32 %v242, 4294901760
        %752 = vmatpush1.xpose.msra.mxu0 %v751
        %753 = vmatprep.subr.mxu0 0.0
        %754 = vmatpush1.xpose.msra.mxu0 0.0
        %755 = vmatprep.subr.mxu0 0.0
        %756 = vmatpush1.xpose.msra.mxu0 0.0
        %757 = vmatprep.subr.mxu0 0.0
        %758 = vmatpush1.xpose.msra.mxu0 0.0
        %759 = vmatprep.subr.mxu0 0.0
        %760 = vmatpush1.xpose.msra.mxu0 0.0
        %761 = vmatprep.subr.mxu0 0.0
        %762 = vmatpush1.xpose.msra.mxu0 0.0
        %763 = vmatprep.subr.mxu0 0.0
        %764 = vmatpush1.xpose.msra.mxu0 0.0
        %765 = vmatprep.subr.mxu0 0.0
        %766 = vmatpush1.xpose.msra.mxu0 0.0
        %767 = vmatprep.subr.mxu0 0.0
        %768 = vmatpush1.xpose.msra.mxu0 0.0
        %769 = vmatprep.subr.mxu0 0.0
        %770 = vmatpush1.xpose.msra.mxu0 0.0
        %771 = vmatprep.subr.mxu0 0.0
        %772 = vmatpush1.xpose.msra.mxu0 0.0
        %773 = vmatprep.subr.mxu0 0.0
        %774 = vmatpush1.xpose.msra.mxu0 0.0
        %775 = vmatprep.subr.mxu0 0.0
        %776 = vmatpush1.xpose.msra.mxu0 0.0
        %777 = vmatprep.subr.mxu0 0.0
        %778 = vmatpush1.xpose.msra.mxu0 0.0
        %779 = vmatprep.subr.mxu0 0.0
        %780 = vmatpush1.xpose.msra.mxu0 0.0
        %781 = vmatprep.subr.mxu0 0.0
        %782 = vmatpush1.xpose.msra.mxu0 0.0
        %783 = vmatprep.subr.mxu0 0.0
        %784 = vmatpush1.xpose.msra.mxu0 0.0
        %785 = vmatprep.subr.mxu0 0.0
        %786 = vmatpush1.xpose.msra.mxu0 0.0
        %787 = vmatprep.subr.mxu0 0.0
        %788 = vmatpush1.xpose.msra.mxu0 0.0
        %789 = vmatprep.subr.mxu0 0.0
        %790 = vmatpush1.xpose.msra.mxu0 0.0
        %791 = vmatprep.subr.mxu0 0.0
        %792 = vmatpush1.xpose.msra.mxu0 0.0
        %793 = vmatprep.subr.mxu0 0.0
        %794 = vmatpush1.xpose.msra.mxu0 0.0
        %795 = vmatprep.subr.mxu0 0.0
        %796 = vmatpush1.xpose.msra.mxu0 0.0
        %797 = vmatprep.subr.mxu0 0.0
        %798 = vmatpush1.xpose.msra.mxu0 0.0
        %799 = vmatprep.subr.mxu0 0.0
        %800 = vmatpush1.xpose.msra.mxu0 0.0
        %801 = vmatprep.subr.mxu0 0.0
        %802 = vmatpush1.xpose.msra.mxu0 0.0
        %803 = vmatprep.subr.mxu0 0.0
        %804 = vmatpush1.xpose.msra.mxu0 0.0
        %805 = vmatprep.subr.mxu0 0.0
        %806 = vmatpush1.xpose.msra.mxu0 0.0
        %807 = vmatprep.subr.mxu0 0.0
        %808 = vmatpush1.xpose.msra.mxu0 0.0
        %v809 = vand.u32 %v254, 4294901760
        %810 = vmatprep.mubr.f32.mxu0 %v809
        %v811 = vand.u32 %v250, 4294901760
        %812 = vmatmul.mubr.f32.gmra.mrb[0].mxu0 %v811
        %v813 = vpop.f32.mrb[0].mxu0
        %v814 = vadd.f32 %v734, %v813
        %v815 = vpop.f32.mrb[0].mxu0
        %816 = vdwg.mxu0
        %v817 = vand.u32 %v233, 4294901760
        %818 = vmatprep.subr.mxu0 %v817
        %v819 = vand.u32 %v232, 4294901760
        %820 = vmatpush1.xpose.msra.mxu0 %v819
        %v821 = vand.u32 %v237, 4294901760
        %822 = vmatprep.subr.mxu0 %v821
        %v823 = vand.u32 %v236, 4294901760
        %824 = vmatpush1.xpose.msra.mxu0 %v823
        %v825 = vand.u32 %v241, 4294901760
        %826 = vmatprep.subr.mxu0 %v825
        %v827 = vand.u32 %v240, 4294901760
        %828 = vmatpush1.xpose.msra.mxu0 %v827
        %v829 = vand.u32 %v245, 4294901760
        %830 = vmatprep.subr.mxu0 %v829
        %v831 = vand.u32 %v244, 4294901760
        %832 = vmatpush1.xpose.msra.mxu0 %v831
        %833 = vmatprep.subr.mxu0 0.0
        %834 = vmatpush1.xpose.msra.mxu0 0.0
        %835 = vmatprep.subr.mxu0 0.0
        %836 = vmatpush1.xpose.msra.mxu0 0.0
        %837 = vmatprep.subr.mxu0 0.0
        %838 = vmatpush1.xpose.msra.mxu0 0.0
        %839 = vmatprep.subr.mxu0 0.0
        %840 = vmatpush1.xpose.msra.mxu0 0.0
        %841 = vmatprep.subr.mxu0 0.0
        %842 = vmatpush1.xpose.msra.mxu0 0.0
        %843 = vmatprep.subr.mxu0 0.0
        %844 = vmatpush1.xpose.msra.mxu0 0.0
        %845 = vmatprep.subr.mxu0 0.0
        %846 = vmatpush1.xpose.msra.mxu0 0.0
        %847 = vmatprep.subr.mxu0 0.0
        %848 = vmatpush1.xpose.msra.mxu0 0.0
        %849 = vmatprep.subr.mxu0 0.0
        %850 = vmatpush1.xpose.msra.mxu0 0.0
        %851 = vmatprep.subr.mxu0 0.0
        %852 = vmatpush1.xpose.msra.mxu0 0.0
        %853 = vmatprep.subr.mxu0 0.0
        %854 = vmatpush1.xpose.msra.mxu0 0.0
        %855 = vmatprep.subr.mxu0 0.0
        %856 = vmatpush1.xpose.msra.mxu0 0.0
        %857 = vmatprep.subr.mxu0 0.0
        %858 = vmatpush1.xpose.msra.mxu0 0.0
        %859 = vmatprep.subr.mxu0 0.0
        %860 = vmatpush1.xpose.msra.mxu0 0.0
        %861 = vmatprep.subr.mxu0 0.0
        %862 = vmatpush1.xpose.msra.mxu0 0.0
        %863 = vmatprep.subr.mxu0 0.0
        %864 = vmatpush1.xpose.msra.mxu0 0.0
        %865 = vmatprep.subr.mxu0 0.0
        %866 = vmatpush1.xpose.msra.mxu0 0.0
        %867 = vmatprep.subr.mxu0 0.0
        %868 = vmatpush1.xpose.msra.mxu0 0.0
        %869 = vmatprep.subr.mxu0 0.0
        %870 = vmatpush1.xpose.msra.mxu0 0.0
        %871 = vmatprep.subr.mxu0 0.0
        %872 = vmatpush1.xpose.msra.mxu0 0.0
        %873 = vmatprep.subr.mxu0 0.0
        %874 = vmatpush1.xpose.msra.mxu0 0.0
        %875 = vmatprep.subr.mxu0 0.0
        %876 = vmatpush1.xpose.msra.mxu0 0.0
        %877 = vmatprep.subr.mxu0 0.0
        %878 = vmatpush1.xpose.msra.mxu0 0.0
        %879 = vmatprep.subr.mxu0 0.0
        %880 = vmatpush1.xpose.msra.mxu0 0.0
        %881 = vmatprep.subr.mxu0 0.0
        %882 = vmatpush1.xpose.msra.mxu0 0.0
        %883 = vmatprep.subr.mxu0 0.0
        %884 = vmatpush1.xpose.msra.mxu0 0.0
        %885 = vmatprep.subr.mxu0 0.0
        %886 = vmatpush1.xpose.msra.mxu0 0.0
        %887 = vmatprep.subr.mxu0 0.0
        %888 = vmatpush1.xpose.msra.mxu0 0.0
        %v889 = vand.u32 %v262, 4294901760
        %v890 = vsub.f32 %v262, %v889
        %v891 = vand.u32 %v890, 4294901760
        %v892 = vsub.f32 %v890, %v891
        %v893 = vand.u32 %v892, 4294901760
        %894 = vmatprep.mubr.f32.mxu0 %v893
        %v895 = vand.u32 %v258, 4294901760
        %v896 = vsub.f32 %v258, %v895
        %v897 = vand.u32 %v896, 4294901760
        %v898 = vsub.f32 %v896, %v897
        %v899 = vand.u32 %v898, 4294901760
        %900 = vmatmul.mubr.f32.gmra.mrb[0].mxu0 %v899
        %v901 = vpop.f32.mrb[0].mxu0
        %v902 = vadd.f32 %v814, %v901
        %v903 = vpop.f32.mrb[0].mxu0
        %904 = vdwg.mxu0
        %v905 = vand.u32 %v233, 4294901760
        %v906 = vsub.f32 %v233, %v905
        %v907 = vand.u32 %v906, 4294901760
        %v908 = vsub.f32 %v906, %v907
        %v909 = vand.u32 %v908, 4294901760
        %910 = vmatprep.subr.mxu0 %v909
        %v911 = vand.u32 %v232, 4294901760
        %v912 = vsub.f32 %v232, %v911
        %v913 = vand.u32 %v912, 4294901760
        %v914 = vsub.f32 %v912, %v913
        %v915 = vand.u32 %v914, 4294901760
        %916 = vmatpush1.xpose.msra.mxu0 %v915
        %v917 = vand.u32 %v237, 4294901760
        %v918 = vsub.f32 %v237, %v917
        %v919 = vand.u32 %v918, 4294901760
        %v920 = vsub.f32 %v918, %v919
        %v921 = vand.u32 %v920, 4294901760
        %922 = vmatprep.subr.mxu0 %v921
        %v923 = vand.u32 %v236, 4294901760
        %v924 = vsub.f32 %v236, %v923
        %v925 = vand.u32 %v924, 4294901760
        %v926 = vsub.f32 %v924, %v925
        %v927 = vand.u32 %v926, 4294901760
        %928 = vmatpush1.xpose.msra.mxu0 %v927
        %v929 = vand.u32 %v241, 4294901760
        %v930 = vsub.f32 %v241, %v929
        %v931 = vand.u32 %v930, 4294901760
        %v932 = vsub.f32 %v930, %v931
        %v933 = vand.u32 %v932, 4294901760
        %934 = vmatprep.subr.mxu0 %v933
        %v935 = vand.u32 %v240, 4294901760
        %v936 = vsub.f32 %v240, %v935
        %v937 = vand.u32 %v936, 4294901760
        %v938 = vsub.f32 %v936, %v937
        %v939 = vand.u32 %v938, 4294901760
        %940 = vmatpush1.xpose.msra.mxu0 %v939
        %v941 = vand.u32 %v245, 4294901760
        %v942 = vsub.f32 %v245, %v941
        %v943 = vand.u32 %v942, 4294901760
        %v944 = vsub.f32 %v942, %v943
        %v945 = vand.u32 %v944, 4294901760
        %946 = vmatprep.subr.mxu0 %v945
        %v947 = vand.u32 %v244, 4294901760
        %v948 = vsub.f32 %v244, %v947
        %v949 = vand.u32 %v948, 4294901760
        %v950 = vsub.f32 %v948, %v949
        %v951 = vand.u32 %v950, 4294901760
        %952 = vmatpush1.xpose.msra.mxu0 %v951
        %953 = vmatprep.subr.mxu0 0.0
        %954 = vmatpush1.xpose.msra.mxu0 0.0
        %955 = vmatprep.subr.mxu0 0.0
        %956 = vmatpush1.xpose.msra.mxu0 0.0
        %957 = vmatprep.subr.mxu0 0.0
        %958 = vmatpush1.xpose.msra.mxu0 0.0
        %959 = vmatprep.subr.mxu0 0.0
        %960 = vmatpush1.xpose.msra.mxu0 0.0
        %961 = vmatprep.subr.mxu0 0.0
        %962 = vmatpush1.xpose.msra.mxu0 0.0
        %963 = vmatprep.subr.mxu0 0.0
        %964 = vmatpush1.xpose.msra.mxu0 0.0
        %965 = vmatprep.subr.mxu0 0.0
        %966 = vmatpush1.xpose.msra.mxu0 0.0
        %967 = vmatprep.subr.mxu0 0.0
        %968 = vmatpush1.xpose.msra.mxu0 0.0
        %969 = vmatprep.subr.mxu0 0.0
        %970 = vmatpush1.xpose.msra.mxu0 0.0
        %971 = vmatprep.subr.mxu0 0.0
        %972 = vmatpush1.xpose.msra.mxu0 0.0
        %973 = vmatprep.subr.mxu0 0.0
        %974 = vmatpush1.xpose.msra.mxu0 0.0
        %975 = vmatprep.subr.mxu0 0.0
        %976 = vmatpush1.xpose.msra.mxu0 0.0
        %977 = vmatprep.subr.mxu0 0.0
        %978 = vmatpush1.xpose.msra.mxu0 0.0
        %979 = vmatprep.subr.mxu0 0.0
        %980 = vmatpush1.xpose.msra.mxu0 0.0
        %981 = vmatprep.subr.mxu0 0.0
        %982 = vmatpush1.xpose.msra.mxu0 0.0
        %983 = vmatprep.subr.mxu0 0.0
        %984 = vmatpush1.xpose.msra.mxu0 0.0
        %985 = vmatprep.subr.mxu0 0.0
        %986 = vmatpush1.xpose.msra.mxu0 0.0
        %987 = vmatprep.subr.mxu0 0.0
        %988 = vmatpush1.xpose.msra.mxu0 0.0
        %989 = vmatprep.subr.mxu0 0.0
        %990 = vmatpush1.xpose.msra.mxu0 0.0
        %991 = vmatprep.subr.mxu0 0.0
        %992 = vmatpush1.xpose.msra.mxu0 0.0
        %993 = vmatprep.subr.mxu0 0.0
        %994 = vmatpush1.xpose.msra.mxu0 0.0
        %995 = vmatprep.subr.mxu0 0.0
        %996 = vmatpush1.xpose.msra.mxu0 0.0
        %997 = vmatprep.subr.mxu0 0.0
        %998 = vmatpush1.xpose.msra.mxu0 0.0
        %999 = vmatprep.subr.mxu0 0.0
        %1000 = vmatpush1.xpose.msra.mxu0 0.0
        %1001 = vmatprep.subr.mxu0 0.0
        %1002 = vmatpush1.xpose.msra.mxu0 0.0
        %1003 = vmatprep.subr.mxu0 0.0
        %1004 = vmatpush1.xpose.msra.mxu0 0.0
        %1005 = vmatprep.subr.mxu0 0.0
        %1006 = vmatpush1.xpose.msra.mxu0 0.0
        %1007 = vmatprep.subr.mxu0 0.0
        %1008 = vmatpush1.xpose.msra.mxu0 0.0
        %v1009 = vand.u32 %v262, 4294901760
        %1010 = vmatprep.mubr.f32.mxu0 %v1009
        %v1011 = vand.u32 %v258, 4294901760
        %1012 = vmatmul.mubr.f32.gmra.mrb[0].mxu0 %v1011
        %v1013 = vpop.f32.mrb[0].mxu0
        %v1014 = vadd.f32 %v902, %v1013
        %v1015 = vpop.f32.mrb[0].mxu0
        %1016 = vdwg.mxu0
        %v1017 = vand.u32 %v233, 4294901760
        %v1018 = vsub.f32 %v233, %v1017
        %1019 = vmatprep.subr.mxu0 %v1018
        %v1020 = vand.u32 %v232, 4294901760
        %v1021 = vsub.f32 %v232, %v1020
        %1022 = vmatpush1.xpose.msra.mxu0 %v1021
        %v1023 = vand.u32 %v237, 4294901760
        %v1024 = vsub.f32 %v237, %v1023
        %1025 = vmatprep.subr.mxu0 %v1024
        %v1026 = vand.u32 %v236, 4294901760
        %v1027 = vsub.f32 %v236, %v1026
        %1028 = vmatpush1.xpose.msra.mxu0 %v1027
        %v1029 = vand.u32 %v241, 4294901760
        %v1030 = vsub.f32 %v241, %v1029
        %1031 = vmatprep.subr.mxu0 %v1030
        %v1032 = vand.u32 %v240, 4294901760
        %v1033 = vsub.f32 %v240, %v1032
        %1034 = vmatpush1.xpose.msra.mxu0 %v1033
        %v1035 = vand.u32 %v245, 4294901760
        %v1036 = vsub.f32 %v245, %v1035
        %1037 = vmatprep.subr.mxu0 %v1036
        %v1038 = vand.u32 %v244, 4294901760
        %v1039 = vsub.f32 %v244, %v1038
        %1040 = vmatpush1.xpose.msra.mxu0 %v1039
        %1041 = vmatprep.subr.mxu0 0.0
        %1042 = vmatpush1.xpose.msra.mxu0 0.0
        %1043 = vmatprep.subr.mxu0 0.0
        %1044 = vmatpush1.xpose.msra.mxu0 0.0
        %1045 = vmatprep.subr.mxu0 0.0
        %1046 = vmatpush1.xpose.msra.mxu0 0.0
        %1047 = vmatprep.subr.mxu0 0.0
        %1048 = vmatpush1.xpose.msra.mxu0 0.0
        %1049 = vmatprep.subr.mxu0 0.0
        %1050 = vmatpush1.xpose.msra.mxu0 0.0
        %1051 = vmatprep.subr.mxu0 0.0
        %1052 = vmatpush1.xpose.msra.mxu0 0.0
        %1053 = vmatprep.subr.mxu0 0.0
        %1054 = vmatpush1.xpose.msra.mxu0 0.0
        %1055 = vmatprep.subr.mxu0 0.0
        %1056 = vmatpush1.xpose.msra.mxu0 0.0
        %1057 = vmatprep.subr.mxu0 0.0
        %1058 = vmatpush1.xpose.msra.mxu0 0.0
        %1059 = vmatprep.subr.mxu0 0.0
        %1060 = vmatpush1.xpose.msra.mxu0 0.0
        %1061 = vmatprep.subr.mxu0 0.0
        %1062 = vmatpush1.xpose.msra.mxu0 0.0
        %1063 = vmatprep.subr.mxu0 0.0
        %1064 = vmatpush1.xpose.msra.mxu0 0.0
        %1065 = vmatprep.subr.mxu0 0.0
        %1066 = vmatpush1.xpose.msra.mxu0 0.0
        %1067 = vmatprep.subr.mxu0 0.0
        %1068 = vmatpush1.xpose.msra.mxu0 0.0
        %1069 = vmatprep.subr.mxu0 0.0
        %1070 = vmatpush1.xpose.msra.mxu0 0.0
        %1071 = vmatprep.subr.mxu0 0.0
        %1072 = vmatpush1.xpose.msra.mxu0 0.0
        %1073 = vmatprep.subr.mxu0 0.0
        %1074 = vmatpush1.xpose.msra.mxu0 0.0
        %1075 = vmatprep.subr.mxu0 0.0
        %1076 = vmatpush1.xpose.msra.mxu0 0.0
        %1077 = vmatprep.subr.mxu0 0.0
        %1078 = vmatpush1.xpose.msra.mxu0 0.0
        %1079 = vmatprep.subr.mxu0 0.0
        %1080 = vmatpush1.xpose.msra.mxu0 0.0
        %1081 = vmatprep.subr.mxu0 0.0
        %1082 = vmatpush1.xpose.msra.mxu0 0.0
        %1083 = vmatprep.subr.mxu0 0.0
        %1084 = vmatpush1.xpose.msra.mxu0 0.0
        %1085 = vmatprep.subr.mxu0 0.0
        %1086 = vmatpush1.xpose.msra.mxu0 0.0
        %1087 = vmatprep.subr.mxu0 0.0
        %1088 = vmatpush1.xpose.msra.mxu0 0.0
        %1089 = vmatprep.subr.mxu0 0.0
        %1090 = vmatpush1.xpose.msra.mxu0 0.0
        %1091 = vmatprep.subr.mxu0 0.0
        %1092 = vmatpush1.xpose.msra.mxu0 0.0
        %1093 = vmatprep.subr.mxu0 0.0
        %1094 = vmatpush1.xpose.msra.mxu0 0.0
        %1095 = vmatprep.subr.mxu0 0.0
        %1096 = vmatpush1.xpose.msra.mxu0 0.0
        %v1097 = vand.u32 %v262, 4294901760
        %v1098 = vsub.f32 %v262, %v1097
        %1099 = vmatprep.mubr.f32.mxu0 %v1098
        %v1100 = vand.u32 %v258, 4294901760
        %v1101 = vsub.f32 %v258, %v1100
        %1102 = vmatmul.mubr.f32.gmra.mrb[0].mxu0 %v1101
        %v1103 = vpop.f32.mrb[0].mxu0
        %v1104 = vadd.f32 %v1014, %v1103
        %v1105 = vpop.f32.mrb[0].mxu0
        %1106 = vdwg.mxu0
        %v1107 = vand.u32 %v233, 4294901760
        %1108 = vmatprep.subr.mxu0 %v1107
        %v1109 = vand.u32 %v232, 4294901760
        %1110 = vmatpush1.xpose.msra.mxu0 %v1109
        %v1111 = vand.u32 %v237, 4294901760
        %1112 = vmatprep.subr.mxu0 %v1111
        %v1113 = vand.u32 %v236, 4294901760
        %1114 = vmatpush1.xpose.msra.mxu0 %v1113
        %v1115 = vand.u32 %v241, 4294901760
        %1116 = vmatprep.subr.mxu0 %v1115
        %v1117 = vand.u32 %v240, 4294901760
        %1118 = vmatpush1.xpose.msra.mxu0 %v1117
        %v1119 = vand.u32 %v245, 4294901760
        %1120 = vmatprep.subr.mxu0 %v1119
        %v1121 = vand.u32 %v244, 4294901760
        %1122 = vmatpush1.xpose.msra.mxu0 %v1121
        %1123 = vmatprep.subr.mxu0 0.0
        %1124 = vmatpush1.xpose.msra.mxu0 0.0
        %1125 = vmatprep.subr.mxu0 0.0
        %1126 = vmatpush1.xpose.msra.mxu0 0.0
        %1127 = vmatprep.subr.mxu0 0.0
        %1128 = vmatpush1.xpose.msra.mxu0 0.0
        %1129 = vmatprep.subr.mxu0 0.0
        %1130 = vmatpush1.xpose.msra.mxu0 0.0
        %1131 = vmatprep.subr.mxu0 0.0
        %1132 = vmatpush1.xpose.msra.mxu0 0.0
        %1133 = vmatprep.subr.mxu0 0.0
        %1134 = vmatpush1.xpose.msra.mxu0 0.0
        %1135 = vmatprep.subr.mxu0 0.0
        %1136 = vmatpush1.xpose.msra.mxu0 0.0
        %1137 = vmatprep.subr.mxu0 0.0
        %1138 = vmatpush1.xpose.msra.mxu0 0.0
        %1139 = vmatprep.subr.mxu0 0.0
        %1140 = vmatpush1.xpose.msra.mxu0 0.0
        %1141 = vmatprep.subr.mxu0 0.0
        %1142 = vmatpush1.xpose.msra.mxu0 0.0
        %1143 = vmatprep.subr.mxu0 0.0
        %1144 = vmatpush1.xpose.msra.mxu0 0.0
        %1145 = vmatprep.subr.mxu0 0.0
        %1146 = vmatpush1.xpose.msra.mxu0 0.0
        %1147 = vmatprep.subr.mxu0 0.0
        %1148 = vmatpush1.xpose.msra.mxu0 0.0
        %1149 = vmatprep.subr.mxu0 0.0
        %1150 = vmatpush1.xpose.msra.mxu0 0.0
        %1151 = vmatprep.subr.mxu0 0.0
        %1152 = vmatpush1.xpose.msra.mxu0 0.0
        %1153 = vmatprep.subr.mxu0 0.0
        %1154 = vmatpush1.xpose.msra.mxu0 0.0
        %1155 = vmatprep.subr.mxu0 0.0
        %1156 = vmatpush1.xpose.msra.mxu0 0.0
        %1157 = vmatprep.subr.mxu0 0.0
        %1158 = vmatpush1.xpose.msra.mxu0 0.0
        %1159 = vmatprep.subr.mxu0 0.0
        %1160 = vmatpush1.xpose.msra.mxu0 0.0
        %1161 = vmatprep.subr.mxu0 0.0
        %1162 = vmatpush1.xpose.msra.mxu0 0.0
        %1163 = vmatprep.subr.mxu0 0.0
        %1164 = vmatpush1.xpose.msra.mxu0 0.0
        %1165 = vmatprep.subr.mxu0 0.0
        %1166 = vmatpush1.xpose.msra.mxu0 0.0
        %1167 = vmatprep.subr.mxu0 0.0
        %1168 = vmatpush1.xpose.msra.mxu0 0.0
        %1169 = vmatprep.subr.mxu0 0.0
        %1170 = vmatpush1.xpose.msra.mxu0 0.0
        %1171 = vmatprep.subr.mxu0 0.0
        %1172 = vmatpush1.xpose.msra.mxu0 0.0
        %1173 = vmatprep.subr.mxu0 0.0
        %1174 = vmatpush1.xpose.msra.mxu0 0.0
        %1175 = vmatprep.subr.mxu0 0.0
        %1176 = vmatpush1.xpose.msra.mxu0 0.0
        %1177 = vmatprep.subr.mxu0 0.0
        %1178 = vmatpush1.xpose.msra.mxu0 0.0
        %v1179 = vand.u32 %v262, 4294901760
        %v1180 = vsub.f32 %v262, %v1179
        %v1181 = vand.u32 %v1180, 4294901760
        %1182 = vmatprep.mubr.f32.mxu0 %v1181
        %v1183 = vand.u32 %v258, 4294901760
        %v1184 = vsub.f32 %v258, %v1183
        %v1185 = vand.u32 %v1184, 4294901760
        %1186 = vmatmul.mubr.f32.gmra.mrb[0].mxu0 %v1185
        %v1187 = vpop.f32.mrb[0].mxu0
        %v1188 = vadd.f32 %v1104, %v1187
        %v1189 = vpop.f32.mrb[0].mxu0
        %1190 = vdwg.mxu0
        %v1191 = vand.u32 %v233, 4294901760
        %v1192 = vsub.f32 %v233, %v1191
        %v1193 = vand.u32 %v1192, 4294901760
        %1194 = vmatprep.subr.mxu0 %v1193
        %v1195 = vand.u32 %v232, 4294901760
        %v1196 = vsub.f32 %v232, %v1195
        %v1197 = vand.u32 %v1196, 4294901760
        %1198 = vmatpush1.xpose.msra.mxu0 %v1197
        %v1199 = vand.u32 %v237, 4294901760
        %v1200 = vsub.f32 %v237, %v1199
        %v1201 = vand.u32 %v1200, 4294901760
        %1202 = vmatprep.subr.mxu0 %v1201
        %v1203 = vand.u32 %v236, 4294901760
        %v1204 = vsub.f32 %v236, %v1203
        %v1205 = vand.u32 %v1204, 4294901760
        %1206 = vmatpush1.xpose.msra.mxu0 %v1205
        %v1207 = vand.u32 %v241, 4294901760
        %v1208 = vsub.f32 %v241, %v1207
        %v1209 = vand.u32 %v1208, 4294901760
        %1210 = vmatprep.subr.mxu0 %v1209
        %v1211 = vand.u32 %v240, 4294901760
        %v1212 = vsub.f32 %v240, %v1211
        %v1213 = vand.u32 %v1212, 4294901760
        %1214 = vmatpush1.xpose.msra.mxu0 %v1213
        %v1215 = vand.u32 %v245, 4294901760
        %v1216 = vsub.f32 %v245, %v1215
        %v1217 = vand.u32 %v1216, 4294901760
        %1218 = vmatprep.subr.mxu0 %v1217
        %v1219 = vand.u32 %v244, 4294901760
        %v1220 = vsub.f32 %v244, %v1219
        %v1221 = vand.u32 %v1220, 4294901760
        %1222 = vmatpush1.xpose.msra.mxu0 %v1221
        %1223 = vmatprep.subr.mxu0 0.0
        %1224 = vmatpush1.xpose.msra.mxu0 0.0
        %1225 = vmatprep.subr.mxu0 0.0
        %1226 = vmatpush1.xpose.msra.mxu0 0.0
        %1227 = vmatprep.subr.mxu0 0.0
        %1228 = vmatpush1.xpose.msra.mxu0 0.0
        %1229 = vmatprep.subr.mxu0 0.0
        %1230 = vmatpush1.xpose.msra.mxu0 0.0
        %1231 = vmatprep.subr.mxu0 0.0
        %1232 = vmatpush1.xpose.msra.mxu0 0.0
        %1233 = vmatprep.subr.mxu0 0.0
        %1234 = vmatpush1.xpose.msra.mxu0 0.0
        %1235 = vmatprep.subr.mxu0 0.0
        %1236 = vmatpush1.xpose.msra.mxu0 0.0
        %1237 = vmatprep.subr.mxu0 0.0
        %1238 = vmatpush1.xpose.msra.mxu0 0.0
        %1239 = vmatprep.subr.mxu0 0.0
        %1240 = vmatpush1.xpose.msra.mxu0 0.0
        %1241 = vmatprep.subr.mxu0 0.0
        %1242 = vmatpush1.xpose.msra.mxu0 0.0
        %1243 = vmatprep.subr.mxu0 0.0
        %1244 = vmatpush1.xpose.msra.mxu0 0.0
        %1245 = vmatprep.subr.mxu0 0.0
        %1246 = vmatpush1.xpose.msra.mxu0 0.0
        %1247 = vmatprep.subr.mxu0 0.0
        %1248 = vmatpush1.xpose.msra.mxu0 0.0
        %1249 = vmatprep.subr.mxu0 0.0
        %1250 = vmatpush1.xpose.msra.mxu0 0.0
        %1251 = vmatprep.subr.mxu0 0.0
        %1252 = vmatpush1.xpose.msra.mxu0 0.0
        %1253 = vmatprep.subr.mxu0 0.0
        %1254 = vmatpush1.xpose.msra.mxu0 0.0
        %1255 = vmatprep.subr.mxu0 0.0
        %1256 = vmatpush1.xpose.msra.mxu0 0.0
        %1257 = vmatprep.subr.mxu0 0.0
        %1258 = vmatpush1.xpose.msra.mxu0 0.0
        %1259 = vmatprep.subr.mxu0 0.0
        %1260 = vmatpush1.xpose.msra.mxu0 0.0
        %1261 = vmatprep.subr.mxu0 0.0
        %1262 = vmatpush1.xpose.msra.mxu0 0.0
        %1263 = vmatprep.subr.mxu0 0.0
        %1264 = vmatpush1.xpose.msra.mxu0 0.0
        %1265 = vmatprep.subr.mxu0 0.0
        %1266 = vmatpush1.xpose.msra.mxu0 0.0
        %1267 = vmatprep.subr.mxu0 0.0
        %1268 = vmatpush1.xpose.msra.mxu0 0.0
        %1269 = vmatprep.subr.mxu0 0.0
        %1270 = vmatpush1.xpose.msra.mxu0 0.0
        %1271 = vmatprep.subr.mxu0 0.0
        %1272 = vmatpush1.xpose.msra.mxu0 0.0
        %1273 = vmatprep.subr.mxu0 0.0
        %1274 = vmatpush1.xpose.msra.mxu0 0.0
        %1275 = vmatprep.subr.mxu0 0.0
        %1276 = vmatpush1.xpose.msra.mxu0 0.0
        %1277 = vmatprep.subr.mxu0 0.0
        %1278 = vmatpush1.xpose.msra.mxu0 0.0
        %v1279 = vand.u32 %v262, 4294901760
        %1280 = vmatprep.mubr.f32.mxu0 %v1279
        %v1281 = vand.u32 %v258, 4294901760
        %1282 = vmatmul.mubr.f32.gmra.mrb[0].mxu0 %v1281
        %v1283 = vpop.f32.mrb[0].mxu0
        %v1284 = vadd.f32 %v1188, %v1283
        %v1285 = vpop.f32.mrb[0].mxu0
        %1286 = vdwg.mxu0
        %v1287 = vand.u32 %v233, 4294901760
        %1288 = vmatprep.subr.mxu0 %v1287
        %v1289 = vand.u32 %v232, 4294901760
        %1290 = vmatpush1.xpose.msra.mxu0 %v1289
        %v1291 = vand.u32 %v237, 4294901760
        %1292 = vmatprep.subr.mxu0 %v1291
        %v1293 = vand.u32 %v236, 4294901760
        %1294 = vmatpush1.xpose.msra.mxu0 %v1293
        %v1295 = vand.u32 %v241, 4294901760
        %1296 = vmatprep.subr.mxu0 %v1295
        %v1297 = vand.u32 %v240, 4294901760
        %1298 = vmatpush1.xpose.msra.mxu0 %v1297
        %v1299 = vand.u32 %v245, 4294901760
        %1300 = vmatprep.subr.mxu0 %v1299
        %v1301 = vand.u32 %v244, 4294901760
        %1302 = vmatpush1.xpose.msra.mxu0 %v1301
        %1303 = vmatprep.subr.mxu0 0.0
        %1304 = vmatpush1.xpose.msra.mxu0 0.0
        %1305 = vmatprep.subr.mxu0 0.0
        %1306 = vmatpush1.xpose.msra.mxu0 0.0
        %1307 = vmatprep.subr.mxu0 0.0
        %1308 = vmatpush1.xpose.msra.mxu0 0.0
        %1309 = vmatprep.subr.mxu0 0.0
        %1310 = vmatpush1.xpose.msra.mxu0 0.0
        %1311 = vmatprep.subr.mxu0 0.0
        %1312 = vmatpush1.xpose.msra.mxu0 0.0
        %1313 = vmatprep.subr.mxu0 0.0
        %1314 = vmatpush1.xpose.msra.mxu0 0.0
        %1315 = vmatprep.subr.mxu0 0.0
        %1316 = vmatpush1.xpose.msra.mxu0 0.0
        %1317 = vmatprep.subr.mxu0 0.0
        %1318 = vmatpush1.xpose.msra.mxu0 0.0
        %1319 = vmatprep.subr.mxu0 0.0
        %1320 = vmatpush1.xpose.msra.mxu0 0.0
        %1321 = vmatprep.subr.mxu0 0.0
        %1322 = vmatpush1.xpose.msra.mxu0 0.0
        %1323 = vmatprep.subr.mxu0 0.0
        %1324 = vmatpush1.xpose.msra.mxu0 0.0
        %1325 = vmatprep.subr.mxu0 0.0
        %1326 = vmatpush1.xpose.msra.mxu0 0.0
        %1327 = vmatprep.subr.mxu0 0.0
        %1328 = vmatpush1.xpose.msra.mxu0 0.0
        %1329 = vmatprep.subr.mxu0 0.0
        %1330 = vmatpush1.xpose.msra.mxu0 0.0
        %1331 = vmatprep.subr.mxu0 0.0
        %1332 = vmatpush1.xpose.msra.mxu0 0.0
        %1333 = vmatprep.subr.mxu0 0.0
        %1334 = vmatpush1.xpose.msra.mxu0 0.0
        %1335 = vmatprep.subr.mxu0 0.0
        %1336 = vmatpush1.xpose.msra.mxu0 0.0
        %1337 = vmatprep.subr.mxu0 0.0
        %1338 = vmatpush1.xpose.msra.mxu0 0.0
        %1339 = vmatprep.subr.mxu0 0.0
        %1340 = vmatpush1.xpose.msra.mxu0 0.0
        %1341 = vmatprep.subr.mxu0 0.0
        %1342 = vmatpush1.xpose.msra.mxu0 0.0
        %1343 = vmatprep.subr.mxu0 0.0
        %1344 = vmatpush1.xpose.msra.mxu0 0.0
        %1345 = vmatprep.subr.mxu0 0.0
        %1346 = vmatpush1.xpose.msra.mxu0 0.0
        %1347 = vmatprep.subr.mxu0 0.0
        %1348 = vmatpush1.xpose.msra.mxu0 0.0
        %1349 = vmatprep.subr.mxu0 0.0
        %1350 = vmatpush1.xpose.msra.mxu0 0.0
        %1351 = vmatprep.subr.mxu0 0.0
        %1352 = vmatpush1.xpose.msra.mxu0 0.0
        %1353 = vmatprep.subr.mxu0 0.0
        %1354 = vmatpush1.xpose.msra.mxu0 0.0
        %1355 = vmatprep.subr.mxu0 0.0
        %1356 = vmatpush1.xpose.msra.mxu0 0.0
        %1357 = vmatprep.subr.mxu0 0.0
        %1358 = vmatpush1.xpose.msra.mxu0 0.0
        %v1359 = vand.u32 %v262, 4294901760
        %1360 = vmatprep.mubr.f32.mxu0 %v1359
        %v1361 = vand.u32 %v258, 4294901760
        %1362 = vmatmul.mubr.f32.gmra.mrb[0].mxu0 %v1361
        %v1363 = vpop.f32.mrb[0].mxu0
        %v1364 = vadd.f32 %v1284, %v1363
        %v1365 = vpop.f32.mrb[0].mxu0
        %1366 = vdwg.mxu0
        %v1367 = vmul.f32 %v1364, 0.0625
        %v1368 = vld [vmem:[%s1] sm:$0x3]
        %v1369 = vld [vmem:[%s2] sm:$0x3]
        %v1370 = vmul.f32 %v1367, %v1368
        %vm1371 = vcmask 253952
        %v1372 = vsel %vm1371, %v1370, 0.0
        %1373 = vadd.xlane.f32.xlu0 %v1372
        %v1374 = vpop.xlane.xlu0 %1373
        %v1375 = vmax.f32 %v1374, 0.0
        %v1376 = vmul.f32 %v1375, %v1369
        %v1377 = vadd.f32 %v1376, 0.0
        %v1379 = vrot.slane %v1368, 1
        %v1381 = vmul.f32 %v1367, %v1379
        %v1382 = vsel %vm1371, %v1381, 0.0
        %1383 = vadd.xlane.f32.xlu0 %v1382
        %v1384 = vpop.xlane.xlu0 %1383
        %v1385 = vmax.f32 %v1384, 0.0
        %v1387 = vrot.slane %v1369, 1
        %v1389 = vmul.f32 %v1385, %v1387
        %v1390 = vadd.f32 %v1377, %v1389
        %v1391 = vxor.u32 %v1390, 2147483648
        %v1392 = vmul.f32 %v1391, 1.442695
        %v1393 = vpow.pop %v1392
        %v1394 = vadd.f32 %v1393, 1.0
        %v1395 = vrcp.pop %v1394
        %v1396 = vmul.f32 1.0, %v1395
        %vm1397 = vcmask 261120
        %v1399 = vsel %vm1397, %v1396, 0
        %v1401 = vand.u32 %v231, 4294901760
        %1402 = vmatprep.subr.mxu0 %v1401
        %v1403 = vand.u32 %v230, 4294901760
        %1404 = vmatpush1.msra.mxu0 %v1403
        %v1405 = vand.u32 %v235, 4294901760
        %1406 = vmatprep.subr.mxu0 %v1405
        %v1407 = vand.u32 %v234, 4294901760
        %1408 = vmatpush1.msra.mxu0 %v1407
        %v1409 = vand.u32 %v239, 4294901760
        %1410 = vmatprep.subr.mxu0 %v1409
        %v1411 = vand.u32 %v238, 4294901760
        %1412 = vmatpush1.msra.mxu0 %v1411
        %v1413 = vand.u32 %v243, 4294901760
        %1414 = vmatprep.subr.mxu0 %v1413
        %v1415 = vand.u32 %v242, 4294901760
        %1416 = vmatpush1.msra.mxu0 %v1415
        %1417 = vmatprep.subr.mxu0 0.0
        %1418 = vmatpush1.msra.mxu0 0.0
        %1419 = vmatprep.subr.mxu0 0.0
        %1420 = vmatpush1.msra.mxu0 0.0
        %1421 = vmatprep.subr.mxu0 0.0
        %1422 = vmatpush1.msra.mxu0 0.0
        %1423 = vmatprep.subr.mxu0 0.0
        %1424 = vmatpush1.msra.mxu0 0.0
        %1425 = vmatprep.subr.mxu0 0.0
        %1426 = vmatpush1.msra.mxu0 0.0
        %1427 = vmatprep.subr.mxu0 0.0
        %1428 = vmatpush1.msra.mxu0 0.0
        %1429 = vmatprep.subr.mxu0 0.0
        %1430 = vmatpush1.msra.mxu0 0.0
        %1431 = vmatprep.subr.mxu0 0.0
        %1432 = vmatpush1.msra.mxu0 0.0
        %1433 = vmatprep.subr.mxu0 0.0
        %1434 = vmatpush1.msra.mxu0 0.0
        %1435 = vmatprep.subr.mxu0 0.0
        %1436 = vmatpush1.msra.mxu0 0.0
        %1437 = vmatprep.subr.mxu0 0.0
        %1438 = vmatpush1.msra.mxu0 0.0
        %1439 = vmatprep.subr.mxu0 0.0
        %1440 = vmatpush1.msra.mxu0 0.0
        %1441 = vmatprep.subr.mxu0 0.0
        %1442 = vmatpush1.msra.mxu0 0.0
        %1443 = vmatprep.subr.mxu0 0.0
        %1444 = vmatpush1.msra.mxu0 0.0
        %1445 = vmatprep.subr.mxu0 0.0
        %1446 = vmatpush1.msra.mxu0 0.0
        %1447 = vmatprep.subr.mxu0 0.0
        %1448 = vmatpush1.msra.mxu0 0.0
        %1449 = vmatprep.subr.mxu0 0.0
        %1450 = vmatpush1.msra.mxu0 0.0
        %1451 = vmatprep.subr.mxu0 0.0
        %1452 = vmatpush1.msra.mxu0 0.0
        %1453 = vmatprep.subr.mxu0 0.0
        %1454 = vmatpush1.msra.mxu0 0.0
        %1455 = vmatprep.subr.mxu0 0.0
        %1456 = vmatpush1.msra.mxu0 0.0
        %1457 = vmatprep.subr.mxu0 0.0
        %1458 = vmatpush1.msra.mxu0 0.0
        %1459 = vmatprep.subr.mxu0 0.0
        %1460 = vmatpush1.msra.mxu0 0.0
        %1461 = vmatprep.subr.mxu0 0.0
        %1462 = vmatpush1.msra.mxu0 0.0
        %1463 = vmatprep.subr.mxu0 0.0
        %1464 = vmatpush1.msra.mxu0 0.0
        %1465 = vmatprep.subr.mxu0 0.0
        %1466 = vmatpush1.msra.mxu0 0.0
        %1467 = vmatprep.subr.mxu0 0.0
        %1468 = vmatpush1.msra.mxu0 0.0
        %1469 = vmatprep.subr.mxu0 0.0
        %1470 = vmatpush1.msra.mxu0 0.0
        %1471 = vmatprep.subr.mxu0 0.0
        %1472 = vmatpush1.msra.mxu0 0.0
        %1473 = vmatprep.mubr.f32.mxu0 0.0
        %v1474 = vand.u32 %v1399, 4294901760
        %v1475 = vsub.f32 %v1399, %v1474
        %v1476 = vand.u32 %v1475, 4294901760
        %v1477 = vsub.f32 %v1475, %v1476
        %v1478 = vand.u32 %v1477, 4294901760
        %1479 = vmatmul.mubr.f32.gmra.mrb[0].mxu0 %v1478
        %v1480 = vpop.f32.mrb[0].mxu0
        %v1481 = vadd.f32 0.0, %v1480
        %v1482 = vpop.f32.mrb[0].mxu0
        %v1483 = vadd.f32 0.0, %v1482
        %1484 = vdwg.mxu0
        %v1485 = vand.u32 %v231, 4294901760
        %v1486 = vsub.f32 %v231, %v1485
        %v1487 = vand.u32 %v1486, 4294901760
        %v1488 = vsub.f32 %v1486, %v1487
        %v1489 = vand.u32 %v1488, 4294901760
        %1490 = vmatprep.subr.mxu0 %v1489
        %v1491 = vand.u32 %v230, 4294901760
        %v1492 = vsub.f32 %v230, %v1491
        %v1493 = vand.u32 %v1492, 4294901760
        %v1494 = vsub.f32 %v1492, %v1493
        %v1495 = vand.u32 %v1494, 4294901760
        %1496 = vmatpush1.msra.mxu0 %v1495
        %v1497 = vand.u32 %v235, 4294901760
        %v1498 = vsub.f32 %v235, %v1497
        %v1499 = vand.u32 %v1498, 4294901760
        %v1500 = vsub.f32 %v1498, %v1499
        %v1501 = vand.u32 %v1500, 4294901760
        %1502 = vmatprep.subr.mxu0 %v1501
        %v1503 = vand.u32 %v234, 4294901760
        %v1504 = vsub.f32 %v234, %v1503
        %v1505 = vand.u32 %v1504, 4294901760
        %v1506 = vsub.f32 %v1504, %v1505
        %v1507 = vand.u32 %v1506, 4294901760
        %1508 = vmatpush1.msra.mxu0 %v1507
        %v1509 = vand.u32 %v239, 4294901760
        %v1510 = vsub.f32 %v239, %v1509
        %v1511 = vand.u32 %v1510, 4294901760
        %v1512 = vsub.f32 %v1510, %v1511
        %v1513 = vand.u32 %v1512, 4294901760
        %1514 = vmatprep.subr.mxu0 %v1513
        %v1515 = vand.u32 %v238, 4294901760
        %v1516 = vsub.f32 %v238, %v1515
        %v1517 = vand.u32 %v1516, 4294901760
        %v1518 = vsub.f32 %v1516, %v1517
        %v1519 = vand.u32 %v1518, 4294901760
        %1520 = vmatpush1.msra.mxu0 %v1519
        %v1521 = vand.u32 %v243, 4294901760
        %v1522 = vsub.f32 %v243, %v1521
        %v1523 = vand.u32 %v1522, 4294901760
        %v1524 = vsub.f32 %v1522, %v1523
        %v1525 = vand.u32 %v1524, 4294901760
        %1526 = vmatprep.subr.mxu0 %v1525
        %v1527 = vand.u32 %v242, 4294901760
        %v1528 = vsub.f32 %v242, %v1527
        %v1529 = vand.u32 %v1528, 4294901760
        %v1530 = vsub.f32 %v1528, %v1529
        %v1531 = vand.u32 %v1530, 4294901760
        %1532 = vmatpush1.msra.mxu0 %v1531
        %1533 = vmatprep.subr.mxu0 0.0
        %1534 = vmatpush1.msra.mxu0 0.0
        %1535 = vmatprep.subr.mxu0 0.0
        %1536 = vmatpush1.msra.mxu0 0.0
        %1537 = vmatprep.subr.mxu0 0.0
        %1538 = vmatpush1.msra.mxu0 0.0
        %1539 = vmatprep.subr.mxu0 0.0
        %1540 = vmatpush1.msra.mxu0 0.0
        %1541 = vmatprep.subr.mxu0 0.0
        %1542 = vmatpush1.msra.mxu0 0.0
        %1543 = vmatprep.subr.mxu0 0.0
        %1544 = vmatpush1.msra.mxu0 0.0
        %1545 = vmatprep.subr.mxu0 0.0
        %1546 = vmatpush1.msra.mxu0 0.0
        %1547 = vmatprep.subr.mxu0 0.0
        %1548 = vmatpush1.msra.mxu0 0.0
        %1549 = vmatprep.subr.mxu0 0.0
        %1550 = vmatpush1.msra.mxu0 0.0
        %1551 = vmatprep.subr.mxu0 0.0
        %1552 = vmatpush1.msra.mxu0 0.0
        %1553 = vmatprep.subr.mxu0 0.0
        %1554 = vmatpush1.msra.mxu0 0.0
        %1555 = vmatprep.subr.mxu0 0.0
        %1556 = vmatpush1.msra.mxu0 0.0
        %1557 = vmatprep.subr.mxu0 0.0
        %1558 = vmatpush1.msra.mxu0 0.0
        %1559 = vmatprep.subr.mxu0 0.0
        %1560 = vmatpush1.msra.mxu0 0.0
        %1561 = vmatprep.subr.mxu0 0.0
        %1562 = vmatpush1.msra.mxu0 0.0
        %1563 = vmatprep.subr.mxu0 0.0
        %1564 = vmatpush1.msra.mxu0 0.0
        %1565 = vmatprep.subr.mxu0 0.0
        %1566 = vmatpush1.msra.mxu0 0.0
        %1567 = vmatprep.subr.mxu0 0.0
        %1568 = vmatpush1.msra.mxu0 0.0
        %1569 = vmatprep.subr.mxu0 0.0
        %1570 = vmatpush1.msra.mxu0 0.0
        %1571 = vmatprep.subr.mxu0 0.0
        %1572 = vmatpush1.msra.mxu0 0.0
        %1573 = vmatprep.subr.mxu0 0.0
        %1574 = vmatpush1.msra.mxu0 0.0
        %1575 = vmatprep.subr.mxu0 0.0
        %1576 = vmatpush1.msra.mxu0 0.0
        %1577 = vmatprep.subr.mxu0 0.0
        %1578 = vmatpush1.msra.mxu0 0.0
        %1579 = vmatprep.subr.mxu0 0.0
        %1580 = vmatpush1.msra.mxu0 0.0
        %1581 = vmatprep.subr.mxu0 0.0
        %1582 = vmatpush1.msra.mxu0 0.0
        %1583 = vmatprep.subr.mxu0 0.0
        %1584 = vmatpush1.msra.mxu0 0.0
        %1585 = vmatprep.subr.mxu0 0.0
        %1586 = vmatpush1.msra.mxu0 0.0
        %1587 = vmatprep.subr.mxu0 0.0
        %1588 = vmatpush1.msra.mxu0 0.0
        %1589 = vmatprep.mubr.f32.mxu0 0.0
        %v1590 = vand.u32 %v1399, 4294901760
        %1591 = vmatmul.mubr.f32.gmra.mrb[0].mxu0 %v1590
        %v1592 = vpop.f32.mrb[0].mxu0
        %v1593 = vadd.f32 %v1481, %v1592
        %v1594 = vpop.f32.mrb[0].mxu0
        %v1595 = vadd.f32 %v1483, %v1594
        %1596 = vdwg.mxu0
        %v1597 = vand.u32 %v231, 4294901760
        %v1598 = vsub.f32 %v231, %v1597
        %1599 = vmatprep.subr.mxu0 %v1598
        %v1600 = vand.u32 %v230, 4294901760
        %v1601 = vsub.f32 %v230, %v1600
        %1602 = vmatpush1.msra.mxu0 %v1601
        %v1603 = vand.u32 %v235, 4294901760
        %v1604 = vsub.f32 %v235, %v1603
        %1605 = vmatprep.subr.mxu0 %v1604
        %v1606 = vand.u32 %v234, 4294901760
        %v1607 = vsub.f32 %v234, %v1606
        %1608 = vmatpush1.msra.mxu0 %v1607
        %v1609 = vand.u32 %v239, 4294901760
        %v1610 = vsub.f32 %v239, %v1609
        %1611 = vmatprep.subr.mxu0 %v1610
        %v1612 = vand.u32 %v238, 4294901760
        %v1613 = vsub.f32 %v238, %v1612
        %1614 = vmatpush1.msra.mxu0 %v1613
        %v1615 = vand.u32 %v243, 4294901760
        %v1616 = vsub.f32 %v243, %v1615
        %1617 = vmatprep.subr.mxu0 %v1616
        %v1618 = vand.u32 %v242, 4294901760
        %v1619 = vsub.f32 %v242, %v1618
        %1620 = vmatpush1.msra.mxu0 %v1619
        %1621 = vmatprep.subr.mxu0 0.0
        %1622 = vmatpush1.msra.mxu0 0.0
        %1623 = vmatprep.subr.mxu0 0.0
        %1624 = vmatpush1.msra.mxu0 0.0
        %1625 = vmatprep.subr.mxu0 0.0
        %1626 = vmatpush1.msra.mxu0 0.0
        %1627 = vmatprep.subr.mxu0 0.0
        %1628 = vmatpush1.msra.mxu0 0.0
        %1629 = vmatprep.subr.mxu0 0.0
        %1630 = vmatpush1.msra.mxu0 0.0
        %1631 = vmatprep.subr.mxu0 0.0
        %1632 = vmatpush1.msra.mxu0 0.0
        %1633 = vmatprep.subr.mxu0 0.0
        %1634 = vmatpush1.msra.mxu0 0.0
        %1635 = vmatprep.subr.mxu0 0.0
        %1636 = vmatpush1.msra.mxu0 0.0
        %1637 = vmatprep.subr.mxu0 0.0
        %1638 = vmatpush1.msra.mxu0 0.0
        %1639 = vmatprep.subr.mxu0 0.0
        %1640 = vmatpush1.msra.mxu0 0.0
        %1641 = vmatprep.subr.mxu0 0.0
        %1642 = vmatpush1.msra.mxu0 0.0
        %1643 = vmatprep.subr.mxu0 0.0
        %1644 = vmatpush1.msra.mxu0 0.0
        %1645 = vmatprep.subr.mxu0 0.0
        %1646 = vmatpush1.msra.mxu0 0.0
        %1647 = vmatprep.subr.mxu0 0.0
        %1648 = vmatpush1.msra.mxu0 0.0
        %1649 = vmatprep.subr.mxu0 0.0
        %1650 = vmatpush1.msra.mxu0 0.0
        %1651 = vmatprep.subr.mxu0 0.0
        %1652 = vmatpush1.msra.mxu0 0.0
        %1653 = vmatprep.subr.mxu0 0.0
        %1654 = vmatpush1.msra.mxu0 0.0
        %1655 = vmatprep.subr.mxu0 0.0
        %1656 = vmatpush1.msra.mxu0 0.0
        %1657 = vmatprep.subr.mxu0 0.0
        %1658 = vmatpush1.msra.mxu0 0.0
        %1659 = vmatprep.subr.mxu0 0.0
        %1660 = vmatpush1.msra.mxu0 0.0
        %1661 = vmatprep.subr.mxu0 0.0
        %1662 = vmatpush1.msra.mxu0 0.0
        %1663 = vmatprep.subr.mxu0 0.0
        %1664 = vmatpush1.msra.mxu0 0.0
        %1665 = vmatprep.subr.mxu0 0.0
        %1666 = vmatpush1.msra.mxu0 0.0
        %1667 = vmatprep.subr.mxu0 0.0
        %1668 = vmatpush1.msra.mxu0 0.0
        %1669 = vmatprep.subr.mxu0 0.0
        %1670 = vmatpush1.msra.mxu0 0.0
        %1671 = vmatprep.subr.mxu0 0.0
        %1672 = vmatpush1.msra.mxu0 0.0
        %1673 = vmatprep.subr.mxu0 0.0
        %1674 = vmatpush1.msra.mxu0 0.0
        %1675 = vmatprep.subr.mxu0 0.0
        %1676 = vmatpush1.msra.mxu0 0.0
        %1677 = vmatprep.mubr.f32.mxu0 0.0
        %v1678 = vand.u32 %v1399, 4294901760
        %v1679 = vsub.f32 %v1399, %v1678
        %1680 = vmatmul.mubr.f32.gmra.mrb[0].mxu0 %v1679
        %v1681 = vpop.f32.mrb[0].mxu0
        %v1682 = vadd.f32 %v1593, %v1681
        %v1683 = vpop.f32.mrb[0].mxu0
        %v1684 = vadd.f32 %v1595, %v1683
        %1685 = vdwg.mxu0
        %v1686 = vand.u32 %v231, 4294901760
        %1687 = vmatprep.subr.mxu0 %v1686
        %v1688 = vand.u32 %v230, 4294901760
        %1689 = vmatpush1.msra.mxu0 %v1688
        %v1690 = vand.u32 %v235, 4294901760
        %1691 = vmatprep.subr.mxu0 %v1690
        %v1692 = vand.u32 %v234, 4294901760
        %1693 = vmatpush1.msra.mxu0 %v1692
        %v1694 = vand.u32 %v239, 4294901760
        %1695 = vmatprep.subr.mxu0 %v1694
        %v1696 = vand.u32 %v238, 4294901760
        %1697 = vmatpush1.msra.mxu0 %v1696
        %v1698 = vand.u32 %v243, 4294901760
        %1699 = vmatprep.subr.mxu0 %v1698
        %v1700 = vand.u32 %v242, 4294901760
        %1701 = vmatpush1.msra.mxu0 %v1700
        %1702 = vmatprep.subr.mxu0 0.0
        %1703 = vmatpush1.msra.mxu0 0.0
        %1704 = vmatprep.subr.mxu0 0.0
        %1705 = vmatpush1.msra.mxu0 0.0
        %1706 = vmatprep.subr.mxu0 0.0
        %1707 = vmatpush1.msra.mxu0 0.0
        %1708 = vmatprep.subr.mxu0 0.0
        %1709 = vmatpush1.msra.mxu0 0.0
        %1710 = vmatprep.subr.mxu0 0.0
        %1711 = vmatpush1.msra.mxu0 0.0
        %1712 = vmatprep.subr.mxu0 0.0
        %1713 = vmatpush1.msra.mxu0 0.0
        %1714 = vmatprep.subr.mxu0 0.0
        %1715 = vmatpush1.msra.mxu0 0.0
        %1716 = vmatprep.subr.mxu0 0.0
        %1717 = vmatpush1.msra.mxu0 0.0
        %1718 = vmatprep.subr.mxu0 0.0
        %1719 = vmatpush1.msra.mxu0 0.0
        %1720 = vmatprep.subr.mxu0 0.0
        %1721 = vmatpush1.msra.mxu0 0.0
        %1722 = vmatprep.subr.mxu0 0.0
        %1723 = vmatpush1.msra.mxu0 0.0
        %1724 = vmatprep.subr.mxu0 0.0
        %1725 = vmatpush1.msra.mxu0 0.0
        %1726 = vmatprep.subr.mxu0 0.0
        %1727 = vmatpush1.msra.mxu0 0.0
        %1728 = vmatprep.subr.mxu0 0.0
        %1729 = vmatpush1.msra.mxu0 0.0
        %1730 = vmatprep.subr.mxu0 0.0
        %1731 = vmatpush1.msra.mxu0 0.0
        %1732 = vmatprep.subr.mxu0 0.0
        %1733 = vmatpush1.msra.mxu0 0.0
        %1734 = vmatprep.subr.mxu0 0.0
        %1735 = vmatpush1.msra.mxu0 0.0
        %1736 = vmatprep.subr.mxu0 0.0
        %1737 = vmatpush1.msra.mxu0 0.0
        %1738 = vmatprep.subr.mxu0 0.0
        %1739 = vmatpush1.msra.mxu0 0.0
        %1740 = vmatprep.subr.mxu0 0.0
        %1741 = vmatpush1.msra.mxu0 0.0
        %1742 = vmatprep.subr.mxu0 0.0
        %1743 = vmatpush1.msra.mxu0 0.0
        %1744 = vmatprep.subr.mxu0 0.0
        %1745 = vmatpush1.msra.mxu0 0.0
        %1746 = vmatprep.subr.mxu0 0.0
        %1747 = vmatpush1.msra.mxu0 0.0
        %1748 = vmatprep.subr.mxu0 0.0
        %1749 = vmatpush1.msra.mxu0 0.0
        %1750 = vmatprep.subr.mxu0 0.0
        %1751 = vmatpush1.msra.mxu0 0.0
        %1752 = vmatprep.subr.mxu0 0.0
        %1753 = vmatpush1.msra.mxu0 0.0
        %1754 = vmatprep.subr.mxu0 0.0
        %1755 = vmatpush1.msra.mxu0 0.0
        %1756 = vmatprep.subr.mxu0 0.0
        %1757 = vmatpush1.msra.mxu0 0.0
        %1758 = vmatprep.mubr.f32.mxu0 0.0
        %v1759 = vand.u32 %v1399, 4294901760
        %v1760 = vsub.f32 %v1399, %v1759
        %v1761 = vand.u32 %v1760, 4294901760
        %1762 = vmatmul.mubr.f32.gmra.mrb[0].mxu0 %v1761
        %v1763 = vpop.f32.mrb[0].mxu0
        %v1764 = vadd.f32 %v1682, %v1763
        %v1765 = vpop.f32.mrb[0].mxu0
        %v1766 = vadd.f32 %v1684, %v1765
        %1767 = vdwg.mxu0
        %v1768 = vand.u32 %v231, 4294901760
        %v1769 = vsub.f32 %v231, %v1768
        %v1770 = vand.u32 %v1769, 4294901760
        %1771 = vmatprep.subr.mxu0 %v1770
        %v1772 = vand.u32 %v230, 4294901760
        %v1773 = vsub.f32 %v230, %v1772
        %v1774 = vand.u32 %v1773, 4294901760
        %1775 = vmatpush1.msra.mxu0 %v1774
        %v1776 = vand.u32 %v235, 4294901760
        %v1777 = vsub.f32 %v235, %v1776
        %v1778 = vand.u32 %v1777, 4294901760
        %1779 = vmatprep.subr.mxu0 %v1778
        %v1780 = vand.u32 %v234, 4294901760
        %v1781 = vsub.f32 %v234, %v1780
        %v1782 = vand.u32 %v1781, 4294901760
        %1783 = vmatpush1.msra.mxu0 %v1782
        %v1784 = vand.u32 %v239, 4294901760
        %v1785 = vsub.f32 %v239, %v1784
        %v1786 = vand.u32 %v1785, 4294901760
        %1787 = vmatprep.subr.mxu0 %v1786
        %v1788 = vand.u32 %v238, 4294901760
        %v1789 = vsub.f32 %v238, %v1788
        %v1790 = vand.u32 %v1789, 4294901760
        %1791 = vmatpush1.msra.mxu0 %v1790
        %v1792 = vand.u32 %v243, 4294901760
        %v1793 = vsub.f32 %v243, %v1792
        %v1794 = vand.u32 %v1793, 4294901760
        %1795 = vmatprep.subr.mxu0 %v1794
        %v1796 = vand.u32 %v242, 4294901760
        %v1797 = vsub.f32 %v242, %v1796
        %v1798 = vand.u32 %v1797, 4294901760
        %1799 = vmatpush1.msra.mxu0 %v1798
        %1800 = vmatprep.subr.mxu0 0.0
        %1801 = vmatpush1.msra.mxu0 0.0
        %1802 = vmatprep.subr.mxu0 0.0
        %1803 = vmatpush1.msra.mxu0 0.0
        %1804 = vmatprep.subr.mxu0 0.0
        %1805 = vmatpush1.msra.mxu0 0.0
        %1806 = vmatprep.subr.mxu0 0.0
        %1807 = vmatpush1.msra.mxu0 0.0
        %1808 = vmatprep.subr.mxu0 0.0
        %1809 = vmatpush1.msra.mxu0 0.0
        %1810 = vmatprep.subr.mxu0 0.0
        %1811 = vmatpush1.msra.mxu0 0.0
        %1812 = vmatprep.subr.mxu0 0.0
        %1813 = vmatpush1.msra.mxu0 0.0
        %1814 = vmatprep.subr.mxu0 0.0
        %1815 = vmatpush1.msra.mxu0 0.0
        %1816 = vmatprep.subr.mxu0 0.0
        %1817 = vmatpush1.msra.mxu0 0.0
        %1818 = vmatprep.subr.mxu0 0.0
        %1819 = vmatpush1.msra.mxu0 0.0
        %1820 = vmatprep.subr.mxu0 0.0
        %1821 = vmatpush1.msra.mxu0 0.0
        %1822 = vmatprep.subr.mxu0 0.0
        %1823 = vmatpush1.msra.mxu0 0.0
        %1824 = vmatprep.subr.mxu0 0.0
        %1825 = vmatpush1.msra.mxu0 0.0
        %1826 = vmatprep.subr.mxu0 0.0
        %1827 = vmatpush1.msra.mxu0 0.0
        %1828 = vmatprep.subr.mxu0 0.0
        %1829 = vmatpush1.msra.mxu0 0.0
        %1830 = vmatprep.subr.mxu0 0.0
        %1831 = vmatpush1.msra.mxu0 0.0
        %1832 = vmatprep.subr.mxu0 0.0
        %1833 = vmatpush1.msra.mxu0 0.0
        %1834 = vmatprep.subr.mxu0 0.0
        %1835 = vmatpush1.msra.mxu0 0.0
        %1836 = vmatprep.subr.mxu0 0.0
        %1837 = vmatpush1.msra.mxu0 0.0
        %1838 = vmatprep.subr.mxu0 0.0
        %1839 = vmatpush1.msra.mxu0 0.0
        %1840 = vmatprep.subr.mxu0 0.0
        %1841 = vmatpush1.msra.mxu0 0.0
        %1842 = vmatprep.subr.mxu0 0.0
        %1843 = vmatpush1.msra.mxu0 0.0
        %1844 = vmatprep.subr.mxu0 0.0
        %1845 = vmatpush1.msra.mxu0 0.0
        %1846 = vmatprep.subr.mxu0 0.0
        %1847 = vmatpush1.msra.mxu0 0.0
        %1848 = vmatprep.subr.mxu0 0.0
        %1849 = vmatpush1.msra.mxu0 0.0
        %1850 = vmatprep.subr.mxu0 0.0
        %1851 = vmatpush1.msra.mxu0 0.0
        %1852 = vmatprep.subr.mxu0 0.0
        %1853 = vmatpush1.msra.mxu0 0.0
        %1854 = vmatprep.subr.mxu0 0.0
        %1855 = vmatpush1.msra.mxu0 0.0
        %1856 = vmatprep.mubr.f32.mxu0 0.0
        %v1857 = vand.u32 %v1399, 4294901760
        %1858 = vmatmul.mubr.f32.gmra.mrb[0].mxu0 %v1857
        %v1859 = vpop.f32.mrb[0].mxu0
        %v1860 = vadd.f32 %v1764, %v1859
        %v1861 = vpop.f32.mrb[0].mxu0
        %v1862 = vadd.f32 %v1766, %v1861
        %1863 = vdwg.mxu0
        %v1864 = vand.u32 %v231, 4294901760
        %1865 = vmatprep.subr.mxu0 %v1864
        %v1866 = vand.u32 %v230, 4294901760
        %1867 = vmatpush1.msra.mxu0 %v1866
        %v1868 = vand.u32 %v235, 4294901760
        %1869 = vmatprep.subr.mxu0 %v1868
        %v1870 = vand.u32 %v234, 4294901760
        %1871 = vmatpush1.msra.mxu0 %v1870
        %v1872 = vand.u32 %v239, 4294901760
        %1873 = vmatprep.subr.mxu0 %v1872
        %v1874 = vand.u32 %v238, 4294901760
        %1875 = vmatpush1.msra.mxu0 %v1874
        %v1876 = vand.u32 %v243, 4294901760
        %1877 = vmatprep.subr.mxu0 %v1876
        %v1878 = vand.u32 %v242, 4294901760
        %1879 = vmatpush1.msra.mxu0 %v1878
        %1880 = vmatprep.subr.mxu0 0.0
        %1881 = vmatpush1.msra.mxu0 0.0
        %1882 = vmatprep.subr.mxu0 0.0
        %1883 = vmatpush1.msra.mxu0 0.0
        %1884 = vmatprep.subr.mxu0 0.0
        %1885 = vmatpush1.msra.mxu0 0.0
        %1886 = vmatprep.subr.mxu0 0.0
        %1887 = vmatpush1.msra.mxu0 0.0
        %1888 = vmatprep.subr.mxu0 0.0
        %1889 = vmatpush1.msra.mxu0 0.0
        %1890 = vmatprep.subr.mxu0 0.0
        %1891 = vmatpush1.msra.mxu0 0.0
        %1892 = vmatprep.subr.mxu0 0.0
        %1893 = vmatpush1.msra.mxu0 0.0
        %1894 = vmatprep.subr.mxu0 0.0
        %1895 = vmatpush1.msra.mxu0 0.0
        %1896 = vmatprep.subr.mxu0 0.0
        %1897 = vmatpush1.msra.mxu0 0.0
        %1898 = vmatprep.subr.mxu0 0.0
        %1899 = vmatpush1.msra.mxu0 0.0
        %1900 = vmatprep.subr.mxu0 0.0
        %1901 = vmatpush1.msra.mxu0 0.0
        %1902 = vmatprep.subr.mxu0 0.0
        %1903 = vmatpush1.msra.mxu0 0.0
        %1904 = vmatprep.subr.mxu0 0.0
        %1905 = vmatpush1.msra.mxu0 0.0
        %1906 = vmatprep.subr.mxu0 0.0
        %1907 = vmatpush1.msra.mxu0 0.0
        %1908 = vmatprep.subr.mxu0 0.0
        %1909 = vmatpush1.msra.mxu0 0.0
        %1910 = vmatprep.subr.mxu0 0.0
        %1911 = vmatpush1.msra.mxu0 0.0
        %1912 = vmatprep.subr.mxu0 0.0
        %1913 = vmatpush1.msra.mxu0 0.0
        %1914 = vmatprep.subr.mxu0 0.0
        %1915 = vmatpush1.msra.mxu0 0.0
        %1916 = vmatprep.subr.mxu0 0.0
        %1917 = vmatpush1.msra.mxu0 0.0
        %1918 = vmatprep.subr.mxu0 0.0
        %1919 = vmatpush1.msra.mxu0 0.0
        %1920 = vmatprep.subr.mxu0 0.0
        %1921 = vmatpush1.msra.mxu0 0.0
        %1922 = vmatprep.subr.mxu0 0.0
        %1923 = vmatpush1.msra.mxu0 0.0
        %1924 = vmatprep.subr.mxu0 0.0
        %1925 = vmatpush1.msra.mxu0 0.0
        %1926 = vmatprep.subr.mxu0 0.0
        %1927 = vmatpush1.msra.mxu0 0.0
        %1928 = vmatprep.subr.mxu0 0.0
        %1929 = vmatpush1.msra.mxu0 0.0
        %1930 = vmatprep.subr.mxu0 0.0
        %1931 = vmatpush1.msra.mxu0 0.0
        %1932 = vmatprep.subr.mxu0 0.0
        %1933 = vmatpush1.msra.mxu0 0.0
        %1934 = vmatprep.subr.mxu0 0.0
        %1935 = vmatpush1.msra.mxu0 0.0
        %1936 = vmatprep.mubr.f32.mxu0 0.0
        %v1937 = vand.u32 %v1399, 4294901760
        %1938 = vmatmul.mubr.f32.gmra.mrb[0].mxu0 %v1937
        %v1939 = vpop.f32.mrb[0].mxu0
        %v1940 = vadd.f32 %v1860, %v1939
        %v1941 = vpop.f32.mrb[0].mxu0
        %v1942 = vadd.f32 %v1862, %v1941
        %1943 = vdwg.mxu0
        %v1944 = vand.u32 %v233, 4294901760
        %1945 = vmatprep.subr.mxu0 %v1944
        %v1946 = vand.u32 %v232, 4294901760
        %1947 = vmatpush1.msra.mxu0 %v1946
        %v1948 = vand.u32 %v237, 4294901760
        %1949 = vmatprep.subr.mxu0 %v1948
        %v1950 = vand.u32 %v236, 4294901760
        %1951 = vmatpush1.msra.mxu0 %v1950
        %v1952 = vand.u32 %v241, 4294901760
        %1953 = vmatprep.subr.mxu0 %v1952
        %v1954 = vand.u32 %v240, 4294901760
        %1955 = vmatpush1.msra.mxu0 %v1954
        %v1956 = vand.u32 %v245, 4294901760
        %1957 = vmatprep.subr.mxu0 %v1956
        %v1958 = vand.u32 %v244, 4294901760
        %1959 = vmatpush1.msra.mxu0 %v1958
        %1960 = vmatprep.subr.mxu0 0.0
        %1961 = vmatpush1.msra.mxu0 0.0
        %1962 = vmatprep.subr.mxu0 0.0
        %1963 = vmatpush1.msra.mxu0 0.0
        %1964 = vmatprep.subr.mxu0 0.0
        %1965 = vmatpush1.msra.mxu0 0.0
        %1966 = vmatprep.subr.mxu0 0.0
        %1967 = vmatpush1.msra.mxu0 0.0
        %1968 = vmatprep.subr.mxu0 0.0
        %1969 = vmatpush1.msra.mxu0 0.0
        %1970 = vmatprep.subr.mxu0 0.0
        %1971 = vmatpush1.msra.mxu0 0.0
        %1972 = vmatprep.subr.mxu0 0.0
        %1973 = vmatpush1.msra.mxu0 0.0
        %1974 = vmatprep.subr.mxu0 0.0
        %1975 = vmatpush1.msra.mxu0 0.0
        %1976 = vmatprep.subr.mxu0 0.0
        %1977 = vmatpush1.msra.mxu0 0.0
        %1978 = vmatprep.subr.mxu0 0.0
        %1979 = vmatpush1.msra.mxu0 0.0
        %1980 = vmatprep.subr.mxu0 0.0
        %1981 = vmatpush1.msra.mxu0 0.0
        %1982 = vmatprep.subr.mxu0 0.0
        %1983 = vmatpush1.msra.mxu0 0.0
        %1984 = vmatprep.subr.mxu0 0.0
        %1985 = vmatpush1.msra.mxu0 0.0
        %1986 = vmatprep.subr.mxu0 0.0
        %1987 = vmatpush1.msra.mxu0 0.0
        %1988 = vmatprep.subr.mxu0 0.0
        %1989 = vmatpush1.msra.mxu0 0.0
        %1990 = vmatprep.subr.mxu0 0.0
        %1991 = vmatpush1.msra.mxu0 0.0
        %1992 = vmatprep.subr.mxu0 0.0
        %1993 = vmatpush1.msra.mxu0 0.0
        %1994 = vmatprep.subr.mxu0 0.0
        %1995 = vmatpush1.msra.mxu0 0.0
        %1996 = vmatprep.subr.mxu0 0.0
        %1997 = vmatpush1.msra.mxu0 0.0
        %1998 = vmatprep.subr.mxu0 0.0
        %1999 = vmatpush1.msra.mxu0 0.0
        %2000 = vmatprep.subr.mxu0 0.0
        %2001 = vmatpush1.msra.mxu0 0.0
        %2002 = vmatprep.subr.mxu0 0.0
        %2003 = vmatpush1.msra.mxu0 0.0
        %2004 = vmatprep.subr.mxu0 0.0
        %2005 = vmatpush1.msra.mxu0 0.0
        %2006 = vmatprep.subr.mxu0 0.0
        %2007 = vmatpush1.msra.mxu0 0.0
        %2008 = vmatprep.subr.mxu0 0.0
        %2009 = vmatpush1.msra.mxu0 0.0
        %2010 = vmatprep.subr.mxu0 0.0
        %2011 = vmatpush1.msra.mxu0 0.0
        %2012 = vmatprep.subr.mxu0 0.0
        %2013 = vmatpush1.msra.mxu0 0.0
        %2014 = vmatprep.subr.mxu0 0.0
        %2015 = vmatpush1.msra.mxu0 0.0
        %2016 = vmatprep.mubr.f32.mxu0 0.0
        %v2017 = vand.u32 %v1399, 4294901760
        %v2018 = vsub.f32 %v1399, %v2017
        %v2019 = vand.u32 %v2018, 4294901760
        %v2020 = vsub.f32 %v2018, %v2019
        %v2021 = vand.u32 %v2020, 4294901760
        %2022 = vmatmul.mubr.f32.gmra.mrb[0].mxu0 %v2021
        %v2023 = vpop.f32.mrb[0].mxu0
        %v2024 = vadd.f32 0.0, %v2023
        %v2025 = vpop.f32.mrb[0].mxu0
        %v2026 = vadd.f32 0.0, %v2025
        %2027 = vdwg.mxu0
        %v2028 = vand.u32 %v233, 4294901760
        %v2029 = vsub.f32 %v233, %v2028
        %v2030 = vand.u32 %v2029, 4294901760
        %v2031 = vsub.f32 %v2029, %v2030
        %v2032 = vand.u32 %v2031, 4294901760
        %2033 = vmatprep.subr.mxu0 %v2032
        %v2034 = vand.u32 %v232, 4294901760
        %v2035 = vsub.f32 %v232, %v2034
        %v2036 = vand.u32 %v2035, 4294901760
        %v2037 = vsub.f32 %v2035, %v2036
        %v2038 = vand.u32 %v2037, 4294901760
        %2039 = vmatpush1.msra.mxu0 %v2038
        %v2040 = vand.u32 %v237, 4294901760
        %v2041 = vsub.f32 %v237, %v2040
        %v2042 = vand.u32 %v2041, 4294901760
        %v2043 = vsub.f32 %v2041, %v2042
        %v2044 = vand.u32 %v2043, 4294901760
        %2045 = vmatprep.subr.mxu0 %v2044
        %v2046 = vand.u32 %v236, 4294901760
        %v2047 = vsub.f32 %v236, %v2046
        %v2048 = vand.u32 %v2047, 4294901760
        %v2049 = vsub.f32 %v2047, %v2048
        %v2050 = vand.u32 %v2049, 4294901760
        %2051 = vmatpush1.msra.mxu0 %v2050
        %v2052 = vand.u32 %v241, 4294901760
        %v2053 = vsub.f32 %v241, %v2052
        %v2054 = vand.u32 %v2053, 4294901760
        %v2055 = vsub.f32 %v2053, %v2054
        %v2056 = vand.u32 %v2055, 4294901760
        %2057 = vmatprep.subr.mxu0 %v2056
        %v2058 = vand.u32 %v240, 4294901760
        %v2059 = vsub.f32 %v240, %v2058
        %v2060 = vand.u32 %v2059, 4294901760
        %v2061 = vsub.f32 %v2059, %v2060
        %v2062 = vand.u32 %v2061, 4294901760
        %2063 = vmatpush1.msra.mxu0 %v2062
        %v2064 = vand.u32 %v245, 4294901760
        %v2065 = vsub.f32 %v245, %v2064
        %v2066 = vand.u32 %v2065, 4294901760
        %v2067 = vsub.f32 %v2065, %v2066
        %v2068 = vand.u32 %v2067, 4294901760
        %2069 = vmatprep.subr.mxu0 %v2068
        %v2070 = vand.u32 %v244, 4294901760
        %v2071 = vsub.f32 %v244, %v2070
        %v2072 = vand.u32 %v2071, 4294901760
        %v2073 = vsub.f32 %v2071, %v2072
        %v2074 = vand.u32 %v2073, 4294901760
        %2075 = vmatpush1.msra.mxu0 %v2074
        %2076 = vmatprep.subr.mxu0 0.0
        %2077 = vmatpush1.msra.mxu0 0.0
        %2078 = vmatprep.subr.mxu0 0.0
        %2079 = vmatpush1.msra.mxu0 0.0
        %2080 = vmatprep.subr.mxu0 0.0
        %2081 = vmatpush1.msra.mxu0 0.0
        %2082 = vmatprep.subr.mxu0 0.0
        %2083 = vmatpush1.msra.mxu0 0.0
        %2084 = vmatprep.subr.mxu0 0.0
        %2085 = vmatpush1.msra.mxu0 0.0
        %2086 = vmatprep.subr.mxu0 0.0
        %2087 = vmatpush1.msra.mxu0 0.0
        %2088 = vmatprep.subr.mxu0 0.0
        %2089 = vmatpush1.msra.mxu0 0.0
        %2090 = vmatprep.subr.mxu0 0.0
        %2091 = vmatpush1.msra.mxu0 0.0
        %2092 = vmatprep.subr.mxu0 0.0
        %2093 = vmatpush1.msra.mxu0 0.0
        %2094 = vmatprep.subr.mxu0 0.0
        %2095 = vmatpush1.msra.mxu0 0.0
        %2096 = vmatprep.subr.mxu0 0.0
        %2097 = vmatpush1.msra.mxu0 0.0
        %2098 = vmatprep.subr.mxu0 0.0
        %2099 = vmatpush1.msra.mxu0 0.0
        %2100 = vmatprep.subr.mxu0 0.0
        %2101 = vmatpush1.msra.mxu0 0.0
        %2102 = vmatprep.subr.mxu0 0.0
        %2103 = vmatpush1.msra.mxu0 0.0
        %2104 = vmatprep.subr.mxu0 0.0
        %2105 = vmatpush1.msra.mxu0 0.0
        %2106 = vmatprep.subr.mxu0 0.0
        %2107 = vmatpush1.msra.mxu0 0.0
        %2108 = vmatprep.subr.mxu0 0.0
        %2109 = vmatpush1.msra.mxu0 0.0
        %2110 = vmatprep.subr.mxu0 0.0
        %2111 = vmatpush1.msra.mxu0 0.0
        %2112 = vmatprep.subr.mxu0 0.0
        %2113 = vmatpush1.msra.mxu0 0.0
        %2114 = vmatprep.subr.mxu0 0.0
        %2115 = vmatpush1.msra.mxu0 0.0
        %2116 = vmatprep.subr.mxu0 0.0
        %2117 = vmatpush1.msra.mxu0 0.0
        %2118 = vmatprep.subr.mxu0 0.0
        %2119 = vmatpush1.msra.mxu0 0.0
        %2120 = vmatprep.subr.mxu0 0.0
        %2121 = vmatpush1.msra.mxu0 0.0
        %2122 = vmatprep.subr.mxu0 0.0
        %2123 = vmatpush1.msra.mxu0 0.0
        %2124 = vmatprep.subr.mxu0 0.0
        %2125 = vmatpush1.msra.mxu0 0.0
        %2126 = vmatprep.subr.mxu0 0.0
        %2127 = vmatpush1.msra.mxu0 0.0
        %2128 = vmatprep.subr.mxu0 0.0
        %2129 = vmatpush1.msra.mxu0 0.0
        %2130 = vmatprep.subr.mxu0 0.0
        %2131 = vmatpush1.msra.mxu0 0.0
        %2132 = vmatprep.mubr.f32.mxu0 0.0
        %v2133 = vand.u32 %v1399, 4294901760
        %2134 = vmatmul.mubr.f32.gmra.mrb[0].mxu0 %v2133
        %v2135 = vpop.f32.mrb[0].mxu0
        %v2136 = vadd.f32 %v2024, %v2135
        %v2137 = vpop.f32.mrb[0].mxu0
        %v2138 = vadd.f32 %v2026, %v2137
        %2139 = vdwg.mxu0
        %v2140 = vand.u32 %v233, 4294901760
        %v2141 = vsub.f32 %v233, %v2140
        %2142 = vmatprep.subr.mxu0 %v2141
        %v2143 = vand.u32 %v232, 4294901760
        %v2144 = vsub.f32 %v232, %v2143
        %2145 = vmatpush1.msra.mxu0 %v2144
        %v2146 = vand.u32 %v237, 4294901760
        %v2147 = vsub.f32 %v237, %v2146
        %2148 = vmatprep.subr.mxu0 %v2147
        %v2149 = vand.u32 %v236, 4294901760
        %v2150 = vsub.f32 %v236, %v2149
        %2151 = vmatpush1.msra.mxu0 %v2150
        %v2152 = vand.u32 %v241, 4294901760
        %v2153 = vsub.f32 %v241, %v2152
        %2154 = vmatprep.subr.mxu0 %v2153
        %v2155 = vand.u32 %v240, 4294901760
        %v2156 = vsub.f32 %v240, %v2155
        %2157 = vmatpush1.msra.mxu0 %v2156
        %v2158 = vand.u32 %v245, 4294901760
        %v2159 = vsub.f32 %v245, %v2158
        %2160 = vmatprep.subr.mxu0 %v2159
        %v2161 = vand.u32 %v244, 4294901760
        %v2162 = vsub.f32 %v244, %v2161
        %2163 = vmatpush1.msra.mxu0 %v2162
        %2164 = vmatprep.subr.mxu0 0.0
        %2165 = vmatpush1.msra.mxu0 0.0
        %2166 = vmatprep.subr.mxu0 0.0
        %2167 = vmatpush1.msra.mxu0 0.0
        %2168 = vmatprep.subr.mxu0 0.0
        %2169 = vmatpush1.msra.mxu0 0.0
        %2170 = vmatprep.subr.mxu0 0.0
        %2171 = vmatpush1.msra.mxu0 0.0
        %2172 = vmatprep.subr.mxu0 0.0
        %2173 = vmatpush1.msra.mxu0 0.0
        %2174 = vmatprep.subr.mxu0 0.0
        %2175 = vmatpush1.msra.mxu0 0.0
        %2176 = vmatprep.subr.mxu0 0.0
        %2177 = vmatpush1.msra.mxu0 0.0
        %2178 = vmatprep.subr.mxu0 0.0
        %2179 = vmatpush1.msra.mxu0 0.0
        %2180 = vmatprep.subr.mxu0 0.0
        %2181 = vmatpush1.msra.mxu0 0.0
        %2182 = vmatprep.subr.mxu0 0.0
        %2183 = vmatpush1.msra.mxu0 0.0
        %2184 = vmatprep.subr.mxu0 0.0
        %2185 = vmatpush1.msra.mxu0 0.0
        %2186 = vmatprep.subr.mxu0 0.0
        %2187 = vmatpush1.msra.mxu0 0.0
        %2188 = vmatprep.subr.mxu0 0.0
        %2189 = vmatpush1.msra.mxu0 0.0
        %2190 = vmatprep.subr.mxu0 0.0
        %2191 = vmatpush1.msra.mxu0 0.0
        %2192 = vmatprep.subr.mxu0 0.0
        %2193 = vmatpush1.msra.mxu0 0.0
        %2194 = vmatprep.subr.mxu0 0.0
        %2195 = vmatpush1.msra.mxu0 0.0
        %2196 = vmatprep.subr.mxu0 0.0
        %2197 = vmatpush1.msra.mxu0 0.0
        %2198 = vmatprep.subr.mxu0 0.0
        %2199 = vmatpush1.msra.mxu0 0.0
        %2200 = vmatprep.subr.mxu0 0.0
        %2201 = vmatpush1.msra.mxu0 0.0
        %2202 = vmatprep.subr.mxu0 0.0
        %2203 = vmatpush1.msra.mxu0 0.0
        %2204 = vmatprep.subr.mxu0 0.0
        %2205 = vmatpush1.msra.mxu0 0.0
        %2206 = vmatprep.subr.mxu0 0.0
        %2207 = vmatpush1.msra.mxu0 0.0
        %2208 = vmatprep.subr.mxu0 0.0
        %2209 = vmatpush1.msra.mxu0 0.0
        %2210 = vmatprep.subr.mxu0 0.0
        %2211 = vmatpush1.msra.mxu0 0.0
        %2212 = vmatprep.subr.mxu0 0.0
        %2213 = vmatpush1.msra.mxu0 0.0
        %2214 = vmatprep.subr.mxu0 0.0
        %2215 = vmatpush1.msra.mxu0 0.0
        %2216 = vmatprep.subr.mxu0 0.0
        %2217 = vmatpush1.msra.mxu0 0.0
        %2218 = vmatprep.subr.mxu0 0.0
        %2219 = vmatpush1.msra.mxu0 0.0
        %2220 = vmatprep.mubr.f32.mxu0 0.0
        %v2221 = vand.u32 %v1399, 4294901760
        %v2222 = vsub.f32 %v1399, %v2221
        %2223 = vmatmul.mubr.f32.gmra.mrb[0].mxu0 %v2222
        %v2224 = vpop.f32.mrb[0].mxu0
        %v2225 = vadd.f32 %v2136, %v2224
        %v2226 = vpop.f32.mrb[0].mxu0
        %v2227 = vadd.f32 %v2138, %v2226
        %2228 = vdwg.mxu0
        %v2229 = vand.u32 %v233, 4294901760
        %2230 = vmatprep.subr.mxu0 %v2229
        %v2231 = vand.u32 %v232, 4294901760
        %2232 = vmatpush1.msra.mxu0 %v2231
        %v2233 = vand.u32 %v237, 4294901760
        %2234 = vmatprep.subr.mxu0 %v2233
        %v2235 = vand.u32 %v236, 4294901760
        %2236 = vmatpush1.msra.mxu0 %v2235
        %v2237 = vand.u32 %v241, 4294901760
        %2238 = vmatprep.subr.mxu0 %v2237
        %v2239 = vand.u32 %v240, 4294901760
        %2240 = vmatpush1.msra.mxu0 %v2239
        %v2241 = vand.u32 %v245, 4294901760
        %2242 = vmatprep.subr.mxu0 %v2241
        %v2243 = vand.u32 %v244, 4294901760
        %2244 = vmatpush1.msra.mxu0 %v2243
        %2245 = vmatprep.subr.mxu0 0.0
        %2246 = vmatpush1.msra.mxu0 0.0
        %2247 = vmatprep.subr.mxu0 0.0
        %2248 = vmatpush1.msra.mxu0 0.0
        %2249 = vmatprep.subr.mxu0 0.0
        %2250 = vmatpush1.msra.mxu0 0.0
        %2251 = vmatprep.subr.mxu0 0.0
        %2252 = vmatpush1.msra.mxu0 0.0
        %2253 = vmatprep.subr.mxu0 0.0
        %2254 = vmatpush1.msra.mxu0 0.0
        %2255 = vmatprep.subr.mxu0 0.0
        %2256 = vmatpush1.msra.mxu0 0.0
        %2257 = vmatprep.subr.mxu0 0.0
        %2258 = vmatpush1.msra.mxu0 0.0
        %2259 = vmatprep.subr.mxu0 0.0
        %2260 = vmatpush1.msra.mxu0 0.0
        %2261 = vmatprep.subr.mxu0 0.0
        %2262 = vmatpush1.msra.mxu0 0.0
        %2263 = vmatprep.subr.mxu0 0.0
        %2264 = vmatpush1.msra.mxu0 0.0
        %2265 = vmatprep.subr.mxu0 0.0
        %2266 = vmatpush1.msra.mxu0 0.0
        %2267 = vmatprep.subr.mxu0 0.0
        %2268 = vmatpush1.msra.mxu0 0.0
        %2269 = vmatprep.subr.mxu0 0.0
        %2270 = vmatpush1.msra.mxu0 0.0
        %2271 = vmatprep.subr.mxu0 0.0
        %2272 = vmatpush1.msra.mxu0 0.0
        %2273 = vmatprep.subr.mxu0 0.0
        %2274 = vmatpush1.msra.mxu0 0.0
        %2275 = vmatprep.subr.mxu0 0.0
        %2276 = vmatpush1.msra.mxu0 0.0
        %2277 = vmatprep.subr.mxu0 0.0
        %2278 = vmatpush1.msra.mxu0 0.0
        %2279 = vmatprep.subr.mxu0 0.0
        %2280 = vmatpush1.msra.mxu0 0.0
        %2281 = vmatprep.subr.mxu0 0.0
        %2282 = vmatpush1.msra.mxu0 0.0
        %2283 = vmatprep.subr.mxu0 0.0
        %2284 = vmatpush1.msra.mxu0 0.0
        %2285 = vmatprep.subr.mxu0 0.0
        %2286 = vmatpush1.msra.mxu0 0.0
        %2287 = vmatprep.subr.mxu0 0.0
        %2288 = vmatpush1.msra.mxu0 0.0
        %2289 = vmatprep.subr.mxu0 0.0
        %2290 = vmatpush1.msra.mxu0 0.0
        %2291 = vmatprep.subr.mxu0 0.0
        %2292 = vmatpush1.msra.mxu0 0.0
        %2293 = vmatprep.subr.mxu0 0.0
        %2294 = vmatpush1.msra.mxu0 0.0
        %2295 = vmatprep.subr.mxu0 0.0
        %2296 = vmatpush1.msra.mxu0 0.0
        %2297 = vmatprep.subr.mxu0 0.0
        %2298 = vmatpush1.msra.mxu0 0.0
        %2299 = vmatprep.subr.mxu0 0.0
        %2300 = vmatpush1.msra.mxu0 0.0
        %2301 = vmatprep.mubr.f32.mxu0 0.0
        %v2302 = vand.u32 %v1399, 4294901760
        %v2303 = vsub.f32 %v1399, %v2302
        %v2304 = vand.u32 %v2303, 4294901760
        %2305 = vmatmul.mubr.f32.gmra.mrb[0].mxu0 %v2304
        %v2306 = vpop.f32.mrb[0].mxu0
        %v2307 = vadd.f32 %v2225, %v2306
        %v2308 = vpop.f32.mrb[0].mxu0
        %v2309 = vadd.f32 %v2227, %v2308
        %2310 = vdwg.mxu0
        %v2311 = vand.u32 %v233, 4294901760
        %v2312 = vsub.f32 %v233, %v2311
        %v2313 = vand.u32 %v2312, 4294901760
        %2314 = vmatprep.subr.mxu0 %v2313
        %v2315 = vand.u32 %v232, 4294901760
        %v2316 = vsub.f32 %v232, %v2315
        %v2317 = vand.u32 %v2316, 4294901760
        %2318 = vmatpush1.msra.mxu0 %v2317
        %v2319 = vand.u32 %v237, 4294901760
        %v2320 = vsub.f32 %v237, %v2319
        %v2321 = vand.u32 %v2320, 4294901760
        %2322 = vmatprep.subr.mxu0 %v2321
        %v2323 = vand.u32 %v236, 4294901760
        %v2324 = vsub.f32 %v236, %v2323
        %v2325 = vand.u32 %v2324, 4294901760
        %2326 = vmatpush1.msra.mxu0 %v2325
        %v2327 = vand.u32 %v241, 4294901760
        %v2328 = vsub.f32 %v241, %v2327
        %v2329 = vand.u32 %v2328, 4294901760
        %2330 = vmatprep.subr.mxu0 %v2329
        %v2331 = vand.u32 %v240, 4294901760
        %v2332 = vsub.f32 %v240, %v2331
        %v2333 = vand.u32 %v2332, 4294901760
        %2334 = vmatpush1.msra.mxu0 %v2333
        %v2335 = vand.u32 %v245, 4294901760
        %v2336 = vsub.f32 %v245, %v2335
        %v2337 = vand.u32 %v2336, 4294901760
        %2338 = vmatprep.subr.mxu0 %v2337
        %v2339 = vand.u32 %v244, 4294901760
        %v2340 = vsub.f32 %v244, %v2339
        %v2341 = vand.u32 %v2340, 4294901760
        %2342 = vmatpush1.msra.mxu0 %v2341
        %2343 = vmatprep.subr.mxu0 0.0
        %2344 = vmatpush1.msra.mxu0 0.0
        %2345 = vmatprep.subr.mxu0 0.0
        %2346 = vmatpush1.msra.mxu0 0.0
        %2347 = vmatprep.subr.mxu0 0.0
        %2348 = vmatpush1.msra.mxu0 0.0
        %2349 = vmatprep.subr.mxu0 0.0
        %2350 = vmatpush1.msra.mxu0 0.0
        %2351 = vmatprep.subr.mxu0 0.0
        %2352 = vmatpush1.msra.mxu0 0.0
        %2353 = vmatprep.subr.mxu0 0.0
        %2354 = vmatpush1.msra.mxu0 0.0
        %2355 = vmatprep.subr.mxu0 0.0
        %2356 = vmatpush1.msra.mxu0 0.0
        %2357 = vmatprep.subr.mxu0 0.0
        %2358 = vmatpush1.msra.mxu0 0.0
        %2359 = vmatprep.subr.mxu0 0.0
        %2360 = vmatpush1.msra.mxu0 0.0
        %2361 = vmatprep.subr.mxu0 0.0
        %2362 = vmatpush1.msra.mxu0 0.0
        %2363 = vmatprep.subr.mxu0 0.0
        %2364 = vmatpush1.msra.mxu0 0.0
        %2365 = vmatprep.subr.mxu0 0.0
        %2366 = vmatpush1.msra.mxu0 0.0
        %2367 = vmatprep.subr.mxu0 0.0
        %2368 = vmatpush1.msra.mxu0 0.0
        %2369 = vmatprep.subr.mxu0 0.0
        %2370 = vmatpush1.msra.mxu0 0.0
        %2371 = vmatprep.subr.mxu0 0.0
        %2372 = vmatpush1.msra.mxu0 0.0
        %2373 = vmatprep.subr.mxu0 0.0
        %2374 = vmatpush1.msra.mxu0 0.0
        %2375 = vmatprep.subr.mxu0 0.0
        %2376 = vmatpush1.msra.mxu0 0.0
        %2377 = vmatprep.subr.mxu0 0.0
        %2378 = vmatpush1.msra.mxu0 0.0
        %2379 = vmatprep.subr.mxu0 0.0
        %2380 = vmatpush1.msra.mxu0 0.0
        %2381 = vmatprep.subr.mxu0 0.0
        %2382 = vmatpush1.msra.mxu0 0.0
        %2383 = vmatprep.subr.mxu0 0.0
        %2384 = vmatpush1.msra.mxu0 0.0
        %2385 = vmatprep.subr.mxu0 0.0
        %2386 = vmatpush1.msra.mxu0 0.0
        %2387 = vmatprep.subr.mxu0 0.0
        %2388 = vmatpush1.msra.mxu0 0.0
        %2389 = vmatprep.subr.mxu0 0.0
        %2390 = vmatpush1.msra.mxu0 0.0
        %2391 = vmatprep.subr.mxu0 0.0
        %2392 = vmatpush1.msra.mxu0 0.0
        %2393 = vmatprep.subr.mxu0 0.0
        %2394 = vmatpush1.msra.mxu0 0.0
        %2395 = vmatprep.subr.mxu0 0.0
        %2396 = vmatpush1.msra.mxu0 0.0
        %2397 = vmatprep.subr.mxu0 0.0
        %2398 = vmatpush1.msra.mxu0 0.0
        %2399 = vmatprep.mubr.f32.mxu0 0.0
        %v2400 = vand.u32 %v1399, 4294901760
        %2401 = vmatmul.mubr.f32.gmra.mrb[0].mxu0 %v2400
        %v2402 = vpop.f32.mrb[0].mxu0
        %v2403 = vadd.f32 %v2307, %v2402
        %v2404 = vpop.f32.mrb[0].mxu0
        %v2405 = vadd.f32 %v2309, %v2404
        %2406 = vdwg.mxu0
        %v2407 = vand.u32 %v233, 4294901760
        %2408 = vmatprep.subr.mxu0 %v2407
        %v2409 = vand.u32 %v232, 4294901760
        %2410 = vmatpush1.msra.mxu0 %v2409
        %v2411 = vand.u32 %v237, 4294901760
        %2412 = vmatprep.subr.mxu0 %v2411
        %v2413 = vand.u32 %v236, 4294901760
        %2414 = vmatpush1.msra.mxu0 %v2413
        %v2415 = vand.u32 %v241, 4294901760
        %2416 = vmatprep.subr.mxu0 %v2415
        %v2417 = vand.u32 %v240, 4294901760
        %2418 = vmatpush1.msra.mxu0 %v2417
        %v2419 = vand.u32 %v245, 4294901760
        %2420 = vmatprep.subr.mxu0 %v2419
        %v2421 = vand.u32 %v244, 4294901760
        %2422 = vmatpush1.msra.mxu0 %v2421
        %2423 = vmatprep.subr.mxu0 0.0
        %2424 = vmatpush1.msra.mxu0 0.0
        %2425 = vmatprep.subr.mxu0 0.0
        %2426 = vmatpush1.msra.mxu0 0.0
        %2427 = vmatprep.subr.mxu0 0.0
        %2428 = vmatpush1.msra.mxu0 0.0
        %2429 = vmatprep.subr.mxu0 0.0
        %2430 = vmatpush1.msra.mxu0 0.0
        %2431 = vmatprep.subr.mxu0 0.0
        %2432 = vmatpush1.msra.mxu0 0.0
        %2433 = vmatprep.subr.mxu0 0.0
        %2434 = vmatpush1.msra.mxu0 0.0
        %2435 = vmatprep.subr.mxu0 0.0
        %2436 = vmatpush1.msra.mxu0 0.0
        %2437 = vmatprep.subr.mxu0 0.0
        %2438 = vmatpush1.msra.mxu0 0.0
        %2439 = vmatprep.subr.mxu0 0.0
        %2440 = vmatpush1.msra.mxu0 0.0
        %2441 = vmatprep.subr.mxu0 0.0
        %2442 = vmatpush1.msra.mxu0 0.0
        %2443 = vmatprep.subr.mxu0 0.0
        %2444 = vmatpush1.msra.mxu0 0.0
        %2445 = vmatprep.subr.mxu0 0.0
        %2446 = vmatpush1.msra.mxu0 0.0
        %2447 = vmatprep.subr.mxu0 0.0
        %2448 = vmatpush1.msra.mxu0 0.0
        %2449 = vmatprep.subr.mxu0 0.0
        %2450 = vmatpush1.msra.mxu0 0.0
        %2451 = vmatprep.subr.mxu0 0.0
        %2452 = vmatpush1.msra.mxu0 0.0
        %2453 = vmatprep.subr.mxu0 0.0
        %2454 = vmatpush1.msra.mxu0 0.0
        %2455 = vmatprep.subr.mxu0 0.0
        %2456 = vmatpush1.msra.mxu0 0.0
        %2457 = vmatprep.subr.mxu0 0.0
        %2458 = vmatpush1.msra.mxu0 0.0
        %2459 = vmatprep.subr.mxu0 0.0
        %2460 = vmatpush1.msra.mxu0 0.0
        %2461 = vmatprep.subr.mxu0 0.0
        %2462 = vmatpush1.msra.mxu0 0.0
        %2463 = vmatprep.subr.mxu0 0.0
        %2464 = vmatpush1.msra.mxu0 0.0
        %2465 = vmatprep.subr.mxu0 0.0
        %2466 = vmatpush1.msra.mxu0 0.0
        %2467 = vmatprep.subr.mxu0 0.0
        %2468 = vmatpush1.msra.mxu0 0.0
        %2469 = vmatprep.subr.mxu0 0.0
        %2470 = vmatpush1.msra.mxu0 0.0
        %2471 = vmatprep.subr.mxu0 0.0
        %2472 = vmatpush1.msra.mxu0 0.0
        %2473 = vmatprep.subr.mxu0 0.0
        %2474 = vmatpush1.msra.mxu0 0.0
        %2475 = vmatprep.subr.mxu0 0.0
        %2476 = vmatpush1.msra.mxu0 0.0
        %2477 = vmatprep.subr.mxu0 0.0
        %2478 = vmatpush1.msra.mxu0 0.0
        %2479 = vmatprep.mubr.f32.mxu0 0.0
        %v2480 = vand.u32 %v1399, 4294901760
        %2481 = vmatmul.mubr.f32.gmra.mrb[0].mxu0 %v2480
        %v2482 = vpop.f32.mrb[0].mxu0
        %v2483 = vadd.f32 %v2403, %v2482
        %v2484 = vpop.f32.mrb[0].mxu0
        %v2485 = vadd.f32 %v2405, %v2484
        %2486 = vdwg.mxu0
        %v2491 = vcombine.low %v1940, %v1942
        %v2492 = vcombine.low %v2483, %v2485
        %v2494 = vunpack.c.l.s4 1966171168
        %v2495 = vunpack.c.0.s8 %v2494
        %v2496 = vlaneseq
        %v2497 = vshrl.u32 %v2496, 7
        %v2498 = vsub.s32 %v2495, %v2497
        %v2499 = vrot.slane %v2491, %v2498
        %v2501 = vunpack.c.l.s4 1966171168
        %v2502 = vunpack.c.0.s8 %v2501
        %v2503 = vlaneseq
        %v2504 = vshrl.u32 %v2503, 7
        %v2505 = vsub.s32 %v2502, %v2504
        %v2506 = vrot.slane %v2492, %v2505
        %v2507 = vcombine.low %v2499, %v2506
        %v2509 = vunpack.c.l.s4 1966171168
        %v2510 = vunpack.c.0.s8 %v2509
        %v2511 = vlaneseq
        %v2512 = vshrl.u32 %v2511, 7
        %v2513 = vsub.s32 %v2510, %v2512
        %v2514 = vrot.slane %v2507, %v2513
        %v2516 = vmul.f32 %v229, %v2514
        %v2517 = vlaneseq
        %vm2518 = vcmp.ge.s32.totalorder %v2517, 0
        %vm2519 = vcmp.lt.s32.totalorder %v2517, 512
        %vm2520 = vmand %vm2518, %vm2519
        %2521 = vst.msk [vmem:[%s228] sm:$0xf] %vm2520, %v2516
        %s2522 = sand.u32 %s119, 1
        %s2523 = scalar_lea.sflag [#allocation4], %s2522
        %s2524 = sand.u32 %s119, 1
        %s2525 = smul.addr %s2524, 4
        %s2526 = scalar_lea.vmem [#allocation7], %s2525
        // Predicated region
        $region45: #{tpu_custom_call.1} parent=35 // pred_check
          %p2527 = pneg %p129
        $region46: #{tpu_custom_call.1} parent=35 // pred_check_branch
          %2529 = sbr.rel (%p2527) target = $region48
        $region47: #{tpu_custom_call.1} parent=35 // pred_region
          %s2531 = ssub.s32 64, 64
          %2532 = vsyncadd %s2523, %s2531
          %s2533 = smul.addr %s22, 4
          %s2534 = smul.addr %s2533, 16
          %s2535 = scalar_lea.hbm %s4, %s2534
          %s2537 = sshll.u32 %s2526, 4
          %s2538 = int_to_ptr.vmem [resolvable:$true] %s2537
          %2540 = dma.vmem_to_hbm [thread:$0]  %s2538, 64, %s2535, %s2523
        $region48: #{tpu_custom_call.1} parent=35 // pred_fallthru
          _
      $region36: #{tpu_custom_call.1} parent=5 // pred_fallthru
        _
      %p2541 = scmp.le.s32.totalorder 2, %s17
      // Predicated region
      $region49: #{tpu_custom_call.1} parent=5 // pred_check
        %p2542 = pneg %p2541
      $region50: #{tpu_custom_call.1} parent=5 // pred_check_branch
        %2544 = sbr.rel (%p2542) target = $region52
      $region51: #{tpu_custom_call.1} parent=5 // pred_region
        %s2545 = ssub.s32 %s17, 2
        // Predicated region
        $region53: #{tpu_custom_call.1} parent=51 // pred_check
          %p2546 = pneg %p135
        $region54: #{tpu_custom_call.1} parent=51 // pred_check_branch
          %2548 = sbr.rel (%p2546) target = $region56
        $region55: #{tpu_custom_call.1} parent=51 // pred_region
          %s2549 = sand.u32 %s120, 1
          %s2550 = scalar_lea.sflag [#allocation4], %s2549
          %s2551 = sand.u32 %s120, 1
          %s2552 = smul.addr %s2551, 4
          %s2553 = scalar_lea.vmem [#allocation7], %s2552
          %2554 = dma.done %s2550, 64
        $region56: #{tpu_custom_call.1} parent=51 // pred_fallthru
          _
      $region52: #{tpu_custom_call.1} parent=5 // pred_fallthru
        _
    $region6: #{tpu_custom_call.1} parent=1 // loop_footer
      %s21 = sadd.s32 1, %s17
    $region7: #{tpu_custom_call.1} parent=1 // loop_footer_branch
      %16 = sbr.rel target = $region3
    $region8: #{tpu_custom_call.1} parent=1 // loop_exit
      _
    %2555 = vsyncpa [#allocation3], 1
    %s2556 = scalar_lea.sflag [#allocation3], 1
    %2557 = vsyncpa %s2556, 1
    %2558 = vsyncpa [#allocation6], 1
    %2559 = vsyncpa [#allocation4], 1
    %s2560 = scalar_lea.sflag [#allocation4], 1
    %2561 = vsyncpa %s2560, 1

</llo_original>
